<compile_context>
chip_gen: v5e
topology: v5e:2x2
jax: 0.10.0
libtpu: 0.0.40
codegen_flags: <defaults>
</compile_context>

<pallas_src>
import jax
import jax.numpy as jnp
from jax import lax
from jax.experimental import pallas as pl
from jax.experimental.pallas import tpu as pltpu


def _round_up(x, m):
    return (x + m - 1) // m * m


def _conv1d_k5(x, w_flat, t_out):
    """Valid Conv1d(kernel=5, stride=1) on x:(T, C) f32 with flattened weights
    w_flat:(5*C, H).  One im2col matmul when C is lane-aligned, otherwise
    5 shifted matmuls.  Returns (t_out, H) f32."""
    _, C = x.shape
    if C % 128 == 0:
        # im2col: lane-aligned concat of the 5 shifted windows -> single MXU
        # matmul with contraction depth 5*C.
        xw = jnp.concatenate([x[k:k + t_out, :] for k in range(5)], axis=-1)
        return jnp.dot(xw.astype(w_flat.dtype), w_flat,
                       preferred_element_type=jnp.float32)
    # Tiny / unaligned channel count (e.g. raw input features): keep the
    # proven shifted-matmul formulation in f32.
    acc = jnp.dot(x[0:t_out, :], w_flat[0:C, :],
                  preferred_element_type=jnp.float32)
    for k in range(1, 5):
        acc = acc + jnp.dot(x[k:k + t_out, :], w_flat[k * C:(k + 1) * C, :],
                            preferred_element_type=jnp.float32)
    return acc


def _maxpool2(x):
    """MaxPool1d(kernel=2, stride=2, ceil_mode=False) along rows of (T, H)."""
    P, H = x.shape[0] // 2, x.shape[1]
    return jnp.max(x[:2 * P, :].reshape(P, 2, H), axis=1)


def _tconv_kernel(x_ref, w1_ref, s1_ref, sh1_ref, w2_ref, s2_ref, sh2_ref,
                  wfc_ref, bfc_ref, vf_ref, logit_ref):
    Bb, T, C_in = x_ref.shape
    T1 = T - 4           # after conv1 (K5)
    P1 = T1 // 2         # after pool1 (P2)
    T2 = P1 - 4          # after conv2 (K5)

    w1 = w1_ref[...]
    if C_in % 128 != 0:
        # fallback conv1 path runs its small matmuls in f32
        w1 = w1.astype(jnp.float32)
    w2 = w2_ref[...]
    wfc = wfc_ref[...]
    s1 = s1_ref[...]
    sh1 = sh1_ref[...]
    s2 = s2_ref[...]
    sh2 = sh2_ref[...]
    bfc = bfc_ref[...]

    # Unrolled loop: one grid step processes Bb batch elements.
    for b in range(Bb):
        x = x_ref[b].astype(jnp.float32)               # (T, C_in)

        a1 = _conv1d_k5(x, w1, T1)                     # (T1, Hp) f32
        a1 = jnp.maximum(a1 * s1 + sh1, 0.0)           # BN (+folded bias) + ReLU
        y1 = _maxpool2(a1)                             # (P1, Hp) f32

        a2 = _conv1d_k5(y1, w2, T2)                    # (T2, Hp) f32
        a2 = jnp.maximum(a2 * s2 + sh2, 0.0)
        y2 = _maxpool2(a2)                             # (T_out, Hp) f32

        vf_ref[b] = y2.astype(vf_ref.dtype)
        logit_ref[b] = (jnp.dot(y2.astype(wfc.dtype), wfc,
                                preferred_element_type=jnp.float32)
                        + bfc).astype(logit_ref.dtype)


def temporal_conv_forward(frame_feat, lgt, params, *,
                          compute_dtype=jnp.bfloat16, batch_block=8):
    """frame_feat: (B, C_in, T) float32 (PyTorch NCL); lgt: (B,) lengths."""
    B, C_in, T = frame_feat.shape
    H = params['w1'].shape[0]
    NC = params['wfc'].shape[0]
    eps = 1e-5
    f32 = jnp.float32

    # conv_type == 2 : K5, P2, K5, P2
    T1 = T - 4
    P1 = T1 // 2
    T2 = P1 - 4
    T_out = T2 // 2
    assert T_out >= 1, "sequence too short for conv_type=2"

    Hp = _round_up(H, 128)          # lane-dense hidden width
    NCp = _round_up(NC, 128)        # lane-dense class width
    Bb = min(batch_block, B)        # batch elements per grid step
    B_pad = _round_up(B, Bb)

    # NCL -> NLC (time on sublanes, channels on lanes).
    # TODO(synk): could read NCL directly and transpose the tile in-kernel to
    # save one HBM pass over the input.
    x = jnp.transpose(frame_feat, (0, 2, 1)).astype(compute_dtype)
    if B_pad != B:
        x = jnp.pad(x, ((0, B_pad - B), (0, 0), (0, 0)))

    # conv weights: PyTorch (out, in, k) -> (k, in, out), zero-pad channels to
    # the lane-dense width, flatten (k, in) to match the im2col row order.
    w1 = jnp.transpose(params['w1'], (2, 1, 0)).astype(f32)        # (5, C_in, H)
    w1 = jnp.pad(w1, ((0, 0), (0, 0), (0, Hp - H))).reshape(5 * C_in, Hp)
    w2 = jnp.transpose(params['w2'], (2, 1, 0)).astype(f32)        # (5, H, H)
    w2 = jnp.pad(w2, ((0, 0), (0, Hp - H), (0, Hp - H))).reshape(5 * Hp, Hp)

    # BatchNorm1d (eval) folded to per-channel scale/shift; conv bias folded
    # into the shift:  y = s*conv + (beta + (b - mean)*s)
    s1v = params['bn1_gamma'] / jnp.sqrt(params['bn1_var'] + eps)
    sh1v = params['bn1_beta'] + (params['b1'] - params['bn1_mean']) * s1v
    s2v = params['bn2_gamma'] / jnp.sqrt(params['bn2_var'] + eps)
    sh2v = params['bn2_beta'] + (params['b2'] - params['bn2_mean']) * s2v

    def pad_h(v):
        return jnp.pad(v.astype(f32), (0, Hp - H)).reshape(1, Hp)

    s1, sh1, s2, sh2 = pad_h(s1v), pad_h(sh1v), pad_h(s2v), pad_h(sh2v)

    wfc = jnp.pad(jnp.transpose(params['wfc'], (1, 0)).astype(f32),
                  ((0, Hp - H), (0, NCp - NC)))                    # (Hp, NCp)
    bfc = jnp.pad(params['bfc'].astype(f32), (0, NCp - NC)).reshape(1, NCp)

    w1 = w1.astype(compute_dtype)
    w2 = w2.astype(compute_dtype)
    wfc = wfc.astype(compute_dtype)

    grid = (B_pad // Bb,)
    vf, logits = pl.pallas_call(
        _tconv_kernel,
        out_shape=(jax.ShapeDtypeStruct((B_pad, T_out, Hp), f32),
                   jax.ShapeDtypeStruct((B_pad, T_out, NCp), f32)),
        grid_spec=pltpu.PrefetchScalarGridSpec(
            num_scalar_prefetch=0,
            grid=grid,
            in_specs=[
                pl.BlockSpec((Bb, T, C_in), lambda b: (b, 0, 0)),   # x
                pl.BlockSpec((5 * C_in, Hp), lambda b: (0, 0)),     # w1 (flat)
                pl.BlockSpec((1, Hp), lambda b: (0, 0)),            # bn1 scale
                pl.BlockSpec((1, Hp), lambda b: (0, 0)),            # bn1 shift
                pl.BlockSpec((5 * Hp, Hp), lambda b: (0, 0)),       # w2 (flat)
                pl.BlockSpec((1, Hp), lambda b: (0, 0)),            # bn2 scale
                pl.BlockSpec((1, Hp), lambda b: (0, 0)),            # bn2 shift
                pl.BlockSpec((Hp, NCp), lambda b: (0, 0)),          # fc weight^T
                pl.BlockSpec((1, NCp), lambda b: (0, 0)),           # fc bias
            ],
            out_specs=[
                pl.BlockSpec((Bb, T_out, Hp), lambda b: (b, 0, 0)),
                pl.BlockSpec((Bb, T_out, NCp), lambda b: (b, 0, 0)),
            ],
        ),
        compiler_params=pltpu.CompilerParams(
            dimension_semantics=("parallel",),
            vmem_limit_bytes=64 * 1024 * 1024),
    )(x, w1, s1, sh1, w2, s2, sh2, wfc, bfc)

    visual_feat = jnp.transpose(vf[:B, :, :H], (1, 0, 2))       # (T_out, B, H)
    conv_logits = jnp.transpose(logits[:B, :, :NC], (1, 0, 2))  # (T_out, B, NC)
    # update_lgt for ['K5','P2','K5','P2'] (torch.div is true division -> float)
    feat_len = ((lgt.astype(f32) - 4.0) / 2.0 - 4.0) / 2.0
    return {'visual_feat': visual_feat,
            'conv_logits': conv_logits,
            'feat_len': feat_len}


# ---------------- pure-JAX reference (for verification only) ----------------
def _ref_forward(frame_feat, lgt, params):
    eps = 1e-5
    x = frame_feat.astype(jnp.float32)   # (B, C, T)

    def conv_bn_relu(x, w, b, gamma, beta, mean, var):
        y = lax.conv_general_dilated(x, w, window_strides=(1,), padding='VALID',
                                     dimension_numbers=('NCH', 'OIH', 'NCH'))
        y = y + b[None, :, None]
        scale = gamma / jnp.sqrt(var + eps)
        y = y * scale[None, :, None] + (beta - mean * scale)[None, :, None]
        return jnp.maximum(y, 0.0)

    def maxpool2(x):
        B, C, T = x.shape
        P = T // 2
        return jnp.max(x[:, :, :2 * P].reshape(B, C, P, 2), axis=-1)

    y = conv_bn_relu(x, params['w1'], params['b1'], params['bn1_gamma'],
                     params['bn1_beta'], params['bn1_mean'], params['bn1_var'])
    y = maxpool2(y)
    y = conv_bn_relu(y, params['w2'], params['b2'], params['bn2_gamma'],
                     params['bn2_beta'], params['bn2_mean'], params['bn2_var'])
    y = maxpool2(y)                                              # (B, H, T_out)
    logits = jnp.einsum('bht,ch->bct', y, params['wfc']) + params['bfc'][None, :, None]
    return {'visual_feat': jnp.transpose(y, (2, 0, 1)),
            'conv_logits': jnp.transpose(logits, (2, 0, 1)),
            'feat_len': ((lgt.astype(jnp.float32) - 4.0) / 2.0 - 4.0) / 2.0}


if __name__ == "__main__":
    B, C_in, T = 2, 4, 32           # input_size=4, sequence length 32
    H, NC = 32, 10                  # hidden_size=32, num_classes=10

    key = jax.random.PRNGKey(0)
    ks = jax.random.split(key, 15)
    fan1 = float(C_in * 5)
    fan2 = float(H * 5)
    params = {
        'w1': jax.random.uniform(ks[0], (H, C_in, 5), minval=-1.0, maxval=1.0) / jnp.sqrt(fan1),
        'b1': jax.random.uniform(ks[1], (H,), minval=-1.0, maxval=1.0) / jnp.sqrt(fan1),
        'w2': jax.random.uniform(ks[2], (H, H, 5), minval=-1.0, maxval=1.0) / jnp.sqrt(fan2),
        'b2': jax.random.uniform(ks[3], (H,), minval=-1.0, maxval=1.0) / jnp.sqrt(fan2),
        'wfc': jax.random.uniform(ks[4], (NC, H), minval=-1.0, maxval=1.0) / jnp.sqrt(float(H)),
        'bfc': jax.random.uniform(ks[5], (NC,), minval=-1.0, maxval=1.0) / jnp.sqrt(float(H)),
        # BatchNorm1d eval-mode parameters / running stats (non-trivial values
        # so the scale/shift + bias folding is actually exercised)
        'bn1_gamma': 1.0 + 0.1 * jax.random.normal(ks[6], (H,)),
        'bn1_beta': 0.1 * jax.random.normal(ks[7], (H,)),
        'bn1_mean': 0.1 * jax.random.normal(ks[8], (H,)),
        'bn1_var': jnp.abs(1.0 + 0.1 * jax.random.normal(ks[9], (H,))),
        'bn2_gamma': 1.0 + 0.1 * jax.random.normal(ks[10], (H,)),
        'bn2_beta': 0.1 * jax.random.normal(ks[11], (H,)),
        'bn2_mean': 0.1 * jax.random.normal(ks[12], (H,)),
        'bn2_var': jnp.abs(1.0 + 0.1 * jax.random.normal(ks[13], (H,))),
    }
    params = {k: v.astype(jnp.float32) for k, v in params.items()}

    frame_feat = jax.random.normal(ks[14], (B, C_in, T), dtype=jnp.float32)
    lgt = jnp.array([32, 30], dtype=jnp.int32)

    ref = _ref_forward(frame_feat, lgt, params)

    # f32 compute path: strict parity with the pure-JAX reference.
    out32 = temporal_conv_forward(frame_feat, lgt, params, compute_dtype=jnp.float32)
    jax.block_until_ready(out32)
    for name in ('visual_feat', 'conv_logits', 'feat_len'):
        a, b = out32[name], ref[name]
        assert a.shape == b.shape, (name, a.shape, b.shape)
        err = float(jnp.max(jnp.abs(a - b)))
        assert err < 1e-2, (name, err)

    # bf16 compute path (default, recommended for v5e/v6e/v7x): loose check.
    out16 = temporal_conv_forward(frame_feat, lgt, params)
    jax.block_until_ready(out16)
    for name in ('visual_feat', 'conv_logits', 'feat_len'):
        a, b = out16[name], ref[name]
        assert a.shape == b.shape, (name, a.shape, b.shape)
        err = float(jnp.max(jnp.abs(a - b)))
        assert err < 5e-2, (name, err)

    print("KERNEL_OK")
</pallas_src>

<mosaic_0001>
module attributes {stable_mosaic.version = 11 : i64} {
  func.func @_tconv_kernel(%arg0: i32, %arg1: memref<2x32x4xf32, #tpu.memory_space<vmem>>, %arg2: memref<20x128xf32, #tpu.memory_space<vmem>>, %arg3: memref<1x128xf32, #tpu.memory_space<vmem>>, %arg4: memref<1x128xf32, #tpu.memory_space<vmem>>, %arg5: memref<640x128xf32, #tpu.memory_space<vmem>>, %arg6: memref<1x128xf32, #tpu.memory_space<vmem>>, %arg7: memref<1x128xf32, #tpu.memory_space<vmem>>, %arg8: memref<128x128xf32, #tpu.memory_space<vmem>>, %arg9: memref<1x128xf32, #tpu.memory_space<vmem>>, %arg10: memref<2x5x128xf32, #tpu.memory_space<vmem>>, %arg11: memref<2x5x128xf32, #tpu.memory_space<vmem>>) attributes {dimension_semantics = [#tpu.dimension_semantics<parallel>], iteration_bounds = array<i64: 1>, scalar_prefetch = 0 : i64, scratch_operands = 0 : i64, tpu.core_type = #tpu.core_type<tc>, window_params = [{transform_indices = @transform_0, window_bounds = array<i64: 2, 32, 4>}, {pipeline_mode = #tpu.pipeline_mode<synchronous>, transform_indices = @transform_1, window_bounds = array<i64: 20, 128>}, {pipeline_mode = #tpu.pipeline_mode<synchronous>, transform_indices = @transform_2, window_bounds = array<i64: 1, 128>}, {pipeline_mode = #tpu.pipeline_mode<synchronous>, transform_indices = @transform_3, window_bounds = array<i64: 1, 128>}, {pipeline_mode = #tpu.pipeline_mode<synchronous>, transform_indices = @transform_4, window_bounds = array<i64: 640, 128>}, {pipeline_mode = #tpu.pipeline_mode<synchronous>, transform_indices = @transform_5, window_bounds = array<i64: 1, 128>}, {pipeline_mode = #tpu.pipeline_mode<synchronous>, transform_indices = @transform_6, window_bounds = array<i64: 1, 128>}, {pipeline_mode = #tpu.pipeline_mode<synchronous>, transform_indices = @transform_7, window_bounds = array<i64: 128, 128>}, {pipeline_mode = #tpu.pipeline_mode<synchronous>, transform_indices = @transform_8, window_bounds = array<i64: 1, 128>}, {transform_indices = @transform_9, window_bounds = array<i64: 2, 5, 128>}, {transform_indices = @transform_10, window_bounds = array<i64: 2, 5, 128>}]} {
    %c0 = arith.constant 0 : index
    %c0_0 = arith.constant 0 : index
    %0 = vector.load %arg2[%c0, %c0_0] : memref<20x128xf32, #tpu.memory_space<vmem>>, vector<20x128xf32>
    %c0_1 = arith.constant 0 : index
    %c0_2 = arith.constant 0 : index
    %1 = vector.load %arg5[%c0_1, %c0_2] : memref<640x128xf32, #tpu.memory_space<vmem>>, vector<640x128xf32>
    %c0_3 = arith.constant 0 : index
    %c0_4 = arith.constant 0 : index
    %2 = vector.load %arg8[%c0_3, %c0_4] : memref<128x128xf32, #tpu.memory_space<vmem>>, vector<128x128xf32>
    %c0_5 = arith.constant 0 : index
    %c0_6 = arith.constant 0 : index
    %3 = vector.load %arg3[%c0_5, %c0_6] : memref<1x128xf32, #tpu.memory_space<vmem>>, vector<1x128xf32>
    %c0_7 = arith.constant 0 : index
    %c0_8 = arith.constant 0 : index
    %4 = vector.load %arg4[%c0_7, %c0_8] : memref<1x128xf32, #tpu.memory_space<vmem>>, vector<1x128xf32>
    %c0_9 = arith.constant 0 : index
    %c0_10 = arith.constant 0 : index
    %5 = vector.load %arg6[%c0_9, %c0_10] : memref<1x128xf32, #tpu.memory_space<vmem>>, vector<1x128xf32>
    %c0_11 = arith.constant 0 : index
    %c0_12 = arith.constant 0 : index
    %6 = vector.load %arg7[%c0_11, %c0_12] : memref<1x128xf32, #tpu.memory_space<vmem>>, vector<1x128xf32>
    %c0_13 = arith.constant 0 : index
    %c0_14 = arith.constant 0 : index
    %7 = vector.load %arg9[%c0_13, %c0_14] : memref<1x128xf32, #tpu.memory_space<vmem>>, vector<1x128xf32>
    %c0_15 = arith.constant 0 : index
    %c0_16 = arith.constant 0 : index
    %c0_17 = arith.constant 0 : index
    %8 = vector.load %arg1[%c0_15, %c0_16, %c0_17] : memref<2x32x4xf32, #tpu.memory_space<vmem>>, vector<1x32x4xf32>
    %9 = vector.shape_cast %8 : vector<1x32x4xf32> to vector<32x4xf32>
    %10 = vector.extract_strided_slice %9 {offsets = [0, 0], sizes = [28, 4], strides = [1, 1]} : vector<32x4xf32> to vector<28x4xf32>
    %11 = vector.extract_strided_slice %0 {offsets = [0, 0], sizes = [4, 128], strides = [1, 1]} : vector<20x128xf32> to vector<4x128xf32>
    %cst = arith.constant dense<0.000000e+00> : vector<28x128xf32>
    %12 = tpu.matmul %10, %11, %cst {dimension_numbers = #tpu.dot_dimension_numbers<[1], [0], [0], [1], [0, 0, 1, 1], [], []>} : vector<28x4xf32>, vector<4x128xf32>, vector<28x128xf32> -> vector<28x128xf32>
    %13 = vector.extract_strided_slice %9 {offsets = [1, 0], sizes = [28, 4], strides = [1, 1]} : vector<32x4xf32> to vector<28x4xf32>
    %14 = vector.extract_strided_slice %0 {offsets = [4, 0], sizes = [4, 128], strides = [1, 1]} : vector<20x128xf32> to vector<4x128xf32>
    %cst_18 = arith.constant dense<0.000000e+00> : vector<28x128xf32>
    %15 = tpu.matmul %13, %14, %cst_18 {dimension_numbers = #tpu.dot_dimension_numbers<[1], [0], [0], [1], [0, 0, 1, 1], [], []>} : vector<28x4xf32>, vector<4x128xf32>, vector<28x128xf32> -> vector<28x128xf32>
    %16 = arith.addf %12, %15 : vector<28x128xf32>
    %17 = vector.extract_strided_slice %9 {offsets = [2, 0], sizes = [28, 4], strides = [1, 1]} : vector<32x4xf32> to vector<28x4xf32>
    %18 = vector.extract_strided_slice %0 {offsets = [8, 0], sizes = [4, 128], strides = [1, 1]} : vector<20x128xf32> to vector<4x128xf32>
    %cst_19 = arith.constant dense<0.000000e+00> : vector<28x128xf32>
    %19 = tpu.matmul %17, %18, %cst_19 {dimension_numbers = #tpu.dot_dimension_numbers<[1], [0], [0], [1], [0, 0, 1, 1], [], []>} : vector<28x4xf32>, vector<4x128xf32>, vector<28x128xf32> -> vector<28x128xf32>
    %20 = arith.addf %16, %19 : vector<28x128xf32>
    %21 = vector.extract_strided_slice %9 {offsets = [3, 0], sizes = [28, 4], strides = [1, 1]} : vector<32x4xf32> to vector<28x4xf32>
    %22 = vector.extract_strided_slice %0 {offsets = [12, 0], sizes = [4, 128], strides = [1, 1]} : vector<20x128xf32> to vector<4x128xf32>
    %cst_20 = arith.constant dense<0.000000e+00> : vector<28x128xf32>
    %23 = tpu.matmul %21, %22, %cst_20 {dimension_numbers = #tpu.dot_dimension_numbers<[1], [0], [0], [1], [0, 0, 1, 1], [], []>} : vector<28x4xf32>, vector<4x128xf32>, vector<28x128xf32> -> vector<28x128xf32>
    %24 = arith.addf %20, %23 : vector<28x128xf32>
    %25 = vector.extract_strided_slice %9 {offsets = [4, 0], sizes = [28, 4], strides = [1, 1]} : vector<32x4xf32> to vector<28x4xf32>
    %26 = vector.extract_strided_slice %0 {offsets = [16, 0], sizes = [4, 128], strides = [1, 1]} : vector<20x128xf32> to vector<4x128xf32>
    %cst_21 = arith.constant dense<0.000000e+00> : vector<28x128xf32>
    %27 = tpu.matmul %25, %26, %cst_21 {dimension_numbers = #tpu.dot_dimension_numbers<[1], [0], [0], [1], [0, 0, 1, 1], [], []>} : vector<28x4xf32>, vector<4x128xf32>, vector<28x128xf32> -> vector<28x128xf32>
    %28 = arith.addf %24, %27 : vector<28x128xf32>
    %29 = vector.broadcast %3 : vector<1x128xf32> to vector<28x128xf32>
    %30 = arith.mulf %28, %29 : vector<28x128xf32>
    %31 = vector.broadcast %4 : vector<1x128xf32> to vector<28x128xf32>
    %32 = arith.addf %30, %31 : vector<28x128xf32>
    %cst_22 = arith.constant 0.000000e+00 : f32
    %33 = vector.broadcast %cst_22 : f32 to vector<28x128xf32>
    %34 = arith.maximumf %32, %33 : vector<28x128xf32>
    %35 = vector.shape_cast %34 : vector<28x128xf32> to vector<14x2x128xf32>
    %cst_23 = arith.constant dense<0xFF800000> : vector<14x128xf32>
    %36 = vector.multi_reduction <maximumf>, %35, %cst_23 [1] : vector<14x2x128xf32> to vector<14x128xf32>
    %37 = vector.extract_strided_slice %36 {offsets = [0, 0], sizes = [10, 128], strides = [1, 1]} : vector<14x128xf32> to vector<10x128xf32>
    %38 = vector.extract_strided_slice %36 {offsets = [1, 0], sizes = [10, 128], strides = [1, 1]} : vector<14x128xf32> to vector<10x128xf32>
    %39 = vector.extract_strided_slice %36 {offsets = [2, 0], sizes = [10, 128], strides = [1, 1]} : vector<14x128xf32> to vector<10x128xf32>
    %40 = vector.extract_strided_slice %36 {offsets = [3, 0], sizes = [10, 128], strides = [1, 1]} : vector<14x128xf32> to vector<10x128xf32>
    %41 = vector.extract_strided_slice %36 {offsets = [4, 0], sizes = [10, 128], strides = [1, 1]} : vector<14x128xf32> to vector<10x128xf32>
    %42 = tpu.concatenate %37, %38, %39, %40, %41 in 1 : vector<10x128xf32>, vector<10x128xf32>, vector<10x128xf32>, vector<10x128xf32>, vector<10x128xf32> -> vector<10x640xf32>
    %cst_24 = arith.constant dense<0.000000e+00> : vector<10x128xf32>
    %43 = tpu.matmul %42, %1, %cst_24 {dimension_numbers = #tpu.dot_dimension_numbers<[1], [0], [0], [1], [0, 0, 1, 1], [], []>} : vector<10x640xf32>, vector<640x128xf32>, vector<10x128xf32> -> vector<10x128xf32>
    %44 = vector.broadcast %5 : vector<1x128xf32> to vector<10x128xf32>
    %45 = arith.mulf %43, %44 : vector<10x128xf32>
    %46 = vector.broadcast %6 : vector<1x128xf32> to vector<10x128xf32>
    %47 = arith.addf %45, %46 : vector<10x128xf32>
    %cst_25 = arith.constant 0.000000e+00 : f32
    %48 = vector.broadcast %cst_25 : f32 to vector<10x128xf32>
    %49 = arith.maximumf %47, %48 : vector<10x128xf32>
    %50 = vector.shape_cast %49 : vector<10x128xf32> to vector<5x2x128xf32>
    %cst_26 = arith.constant dense<0xFF800000> : vector<5x128xf32>
    %51 = vector.multi_reduction <maximumf>, %50, %cst_26 [1] : vector<5x2x128xf32> to vector<5x128xf32>
    %c0_27 = arith.constant 0 : index
    %c0_28 = arith.constant 0 : index
    %c0_29 = arith.constant 0 : index
    %52 = vector.load %arg10[%c0_27, %c0_28, %c0_29] : memref<2x5x128xf32, #tpu.memory_space<vmem>>, vector<1x5x128xf32>
    %53 = vector.shape_cast %52 : vector<1x5x128xf32> to vector<5x128xf32>
    %54 = vector.shape_cast %51 : vector<5x128xf32> to vector<1x5x128xf32>
    tpu.vector_store %arg10[%c0_27, %c0_28, %c0_29], %54 {strides = array<i32>} : memref<2x5x128xf32, #tpu.memory_space<vmem>>, vector<1x5x128xf32>,
    %cst_30 = arith.constant dense<0.000000e+00> : vector<5x128xf32>
    %55 = tpu.matmul %51, %2, %cst_30 {dimension_numbers = #tpu.dot_dimension_numbers<[1], [0], [0], [1], [0, 0, 1, 1], [], []>} : vector<5x128xf32>, vector<128x128xf32>, vector<5x128xf32> -> vector<5x128xf32>
    %56 = vector.broadcast %7 : vector<1x128xf32> to vector<5x128xf32>
    %57 = arith.addf %55, %56 : vector<5x128xf32>
    %c0_31 = arith.constant 0 : index
    %c0_32 = arith.constant 0 : index
    %c0_33 = arith.constant 0 : index
    %58 = vector.load %arg11[%c0_31, %c0_32, %c0_33] : memref<2x5x128xf32, #tpu.memory_space<vmem>>, vector<1x5x128xf32>
    %59 = vector.shape_cast %58 : vector<1x5x128xf32> to vector<5x128xf32>
    %60 = vector.shape_cast %57 : vector<5x128xf32> to vector<1x5x128xf32>
    tpu.vector_store %arg11[%c0_31, %c0_32, %c0_33], %60 {strides = array<i32>} : memref<2x5x128xf32, #tpu.memory_space<vmem>>, vector<1x5x128xf32>,
    %c1 = arith.constant 1 : index
    %c0_34 = arith.constant 0 : index
    %c0_35 = arith.constant 0 : index
    %61 = vector.load %arg1[%c1, %c0_34, %c0_35] : memref<2x32x4xf32, #tpu.memory_space<vmem>>, vector<1x32x4xf32>
    %62 = vector.shape_cast %61 : vector<1x32x4xf32> to vector<32x4xf32>
    %63 = vector.extract_strided_slice %62 {offsets = [0, 0], sizes = [28, 4], strides = [1, 1]} : vector<32x4xf32> to vector<28x4xf32>
    %64 = vector.extract_strided_slice %0 {offsets = [0, 0], sizes = [4, 128], strides = [1, 1]} : vector<20x128xf32> to vector<4x128xf32>
    %cst_36 = arith.constant dense<0.000000e+00> : vector<28x128xf32>
    %65 = tpu.matmul %63, %64, %cst_36 {dimension_numbers = #tpu.dot_dimension_numbers<[1], [0], [0], [1], [0, 0, 1, 1], [], []>} : vector<28x4xf32>, vector<4x128xf32>, vector<28x128xf32> -> vector<28x128xf32>
    %66 = vector.extract_strided_slice %62 {offsets = [1, 0], sizes = [28, 4], strides = [1, 1]} : vector<32x4xf32> to vector<28x4xf32>
    %67 = vector.extract_strided_slice %0 {offsets = [4, 0], sizes = [4, 128], strides = [1, 1]} : vector<20x128xf32> to vector<4x128xf32>
    %cst_37 = arith.constant dense<0.000000e+00> : vector<28x128xf32>
    %68 = tpu.matmul %66, %67, %cst_37 {dimension_numbers = #tpu.dot_dimension_numbers<[1], [0], [0], [1], [0, 0, 1, 1], [], []>} : vector<28x4xf32>, vector<4x128xf32>, vector<28x128xf32> -> vector<28x128xf32>
    %69 = arith.addf %65, %68 : vector<28x128xf32>
    %70 = vector.extract_strided_slice %62 {offsets = [2, 0], sizes = [28, 4], strides = [1, 1]} : vector<32x4xf32> to vector<28x4xf32>
    %71 = vector.extract_strided_slice %0 {offsets = [8, 0], sizes = [4, 128], strides = [1, 1]} : vector<20x128xf32> to vector<4x128xf32>
    %cst_38 = arith.constant dense<0.000000e+00> : vector<28x128xf32>
    %72 = tpu.matmul %70, %71, %cst_38 {dimension_numbers = #tpu.dot_dimension_numbers<[1], [0], [0], [1], [0, 0, 1, 1], [], []>} : vector<28x4xf32>, vector<4x128xf32>, vector<28x128xf32> -> vector<28x128xf32>
    %73 = arith.addf %69, %72 : vector<28x128xf32>
    %74 = vector.extract_strided_slice %62 {offsets = [3, 0], sizes = [28, 4], strides = [1, 1]} : vector<32x4xf32> to vector<28x4xf32>
    %75 = vector.extract_strided_slice %0 {offsets = [12, 0], sizes = [4, 128], strides = [1, 1]} : vector<20x128xf32> to vector<4x128xf32>
    %cst_39 = arith.constant dense<0.000000e+00> : vector<28x128xf32>
    %76 = tpu.matmul %74, %75, %cst_39 {dimension_numbers = #tpu.dot_dimension_numbers<[1], [0], [0], [1], [0, 0, 1, 1], [], []>} : vector<28x4xf32>, vector<4x128xf32>, vector<28x128xf32> -> vector<28x128xf32>
    %77 = arith.addf %73, %76 : vector<28x128xf32>
    %78 = vector.extract_strided_slice %62 {offsets = [4, 0], sizes = [28, 4], strides = [1, 1]} : vector<32x4xf32> to vector<28x4xf32>
    %79 = vector.extract_strided_slice %0 {offsets = [16, 0], sizes = [4, 128], strides = [1, 1]} : vector<20x128xf32> to vector<4x128xf32>
    %cst_40 = arith.constant dense<0.000000e+00> : vector<28x128xf32>
    %80 = tpu.matmul %78, %79, %cst_40 {dimension_numbers = #tpu.dot_dimension_numbers<[1], [0], [0], [1], [0, 0, 1, 1], [], []>} : vector<28x4xf32>, vector<4x128xf32>, vector<28x128xf32> -> vector<28x128xf32>
    %81 = arith.addf %77, %80 : vector<28x128xf32>
    %82 = vector.broadcast %3 : vector<1x128xf32> to vector<28x128xf32>
    %83 = arith.mulf %81, %82 : vector<28x128xf32>
    %84 = vector.broadcast %4 : vector<1x128xf32> to vector<28x128xf32>
    %85 = arith.addf %83, %84 : vector<28x128xf32>
    %cst_41 = arith.constant 0.000000e+00 : f32
    %86 = vector.broadcast %cst_41 : f32 to vector<28x128xf32>
    %87 = arith.maximumf %85, %86 : vector<28x128xf32>
    %88 = vector.shape_cast %87 : vector<28x128xf32> to vector<14x2x128xf32>
    %cst_42 = arith.constant dense<0xFF800000> : vector<14x128xf32>
    %89 = vector.multi_reduction <maximumf>, %88, %cst_42 [1] : vector<14x2x128xf32> to vector<14x128xf32>
    %90 = vector.extract_strided_slice %89 {offsets = [0, 0], sizes = [10, 128], strides = [1, 1]} : vector<14x128xf32> to vector<10x128xf32>
    %91 = vector.extract_strided_slice %89 {offsets = [1, 0], sizes = [10, 128], strides = [1, 1]} : vector<14x128xf32> to vector<10x128xf32>
    %92 = vector.extract_strided_slice %89 {offsets = [2, 0], sizes = [10, 128], strides = [1, 1]} : vector<14x128xf32> to vector<10x128xf32>
    %93 = vector.extract_strided_slice %89 {offsets = [3, 0], sizes = [10, 128], strides = [1, 1]} : vector<14x128xf32> to vector<10x128xf32>
    %94 = vector.extract_strided_slice %89 {offsets = [4, 0], sizes = [10, 128], strides = [1, 1]} : vector<14x128xf32> to vector<10x128xf32>
    %95 = tpu.concatenate %90, %91, %92, %93, %94 in 1 : vector<10x128xf32>, vector<10x128xf32>, vector<10x128xf32>, vector<10x128xf32>, vector<10x128xf32> -> vector<10x640xf32>
    %cst_43 = arith.constant dense<0.000000e+00> : vector<10x128xf32>
    %96 = tpu.matmul %95, %1, %cst_43 {dimension_numbers = #tpu.dot_dimension_numbers<[1], [0], [0], [1], [0, 0, 1, 1], [], []>} : vector<10x640xf32>, vector<640x128xf32>, vector<10x128xf32> -> vector<10x128xf32>
    %97 = vector.broadcast %5 : vector<1x128xf32> to vector<10x128xf32>
    %98 = arith.mulf %96, %97 : vector<10x128xf32>
    %99 = vector.broadcast %6 : vector<1x128xf32> to vector<10x128xf32>
    %100 = arith.addf %98, %99 : vector<10x128xf32>
    %cst_44 = arith.constant 0.000000e+00 : f32
    %101 = vector.broadcast %cst_44 : f32 to vector<10x128xf32>
    %102 = arith.maximumf %100, %101 : vector<10x128xf32>
    %103 = vector.shape_cast %102 : vector<10x128xf32> to vector<5x2x128xf32>
    %cst_45 = arith.constant dense<0xFF800000> : vector<5x128xf32>
    %104 = vector.multi_reduction <maximumf>, %103, %cst_45 [1] : vector<5x2x128xf32> to vector<5x128xf32>
    %c1_46 = arith.constant 1 : index
    %c0_47 = arith.constant 0 : index
    %c0_48 = arith.constant 0 : index
    %105 = vector.load %arg10[%c1_46, %c0_47, %c0_48] : memref<2x5x128xf32, #tpu.memory_space<vmem>>, vector<1x5x128xf32>
    %106 = vector.shape_cast %105 : vector<1x5x128xf32> to vector<5x128xf32>
    %107 = vector.shape_cast %104 : vector<5x128xf32> to vector<1x5x128xf32>
    tpu.vector_store %arg10[%c1_46, %c0_47, %c0_48], %107 {strides = array<i32>} : memref<2x5x128xf32, #tpu.memory_space<vmem>>, vector<1x5x128xf32>,
    %cst_49 = arith.constant dense<0.000000e+00> : vector<5x128xf32>
    %108 = tpu.matmul %104, %2, %cst_49 {dimension_numbers = #tpu.dot_dimension_numbers<[1], [0], [0], [1], [0, 0, 1, 1], [], []>} : vector<5x128xf32>, vector<128x128xf32>, vector<5x128xf32> -> vector<5x128xf32>
    %109 = vector.broadcast %7 : vector<1x128xf32> to vector<5x128xf32>
    %110 = arith.addf %108, %109 : vector<5x128xf32>
    %c1_50 = arith.constant 1 : index
    %c0_51 = arith.constant 0 : index
    %c0_52 = arith.constant 0 : index
    %111 = vector.load %arg11[%c1_50, %c0_51, %c0_52] : memref<2x5x128xf32, #tpu.memory_space<vmem>>, vector<1x5x128xf32>
    %112 = vector.shape_cast %111 : vector<1x5x128xf32> to vector<5x128xf32>
    %113 = vector.shape_cast %110 : vector<5x128xf32> to vector<1x5x128xf32>
    tpu.vector_store %arg11[%c1_50, %c0_51, %c0_52], %113 {strides = array<i32>} : memref<2x5x128xf32, #tpu.memory_space<vmem>>, vector<1x5x128xf32>,
    return
  }
  func.func @transform_0(%arg0: i32) -> (i32, i32, i32) {
    %c0_i32 = arith.constant 0 : i32
    %c0_i32_0 = arith.constant 0 : i32
    %c0_i32_1 = arith.constant 0 : i32
    return %arg0, %c0_i32, %c0_i32_0 : i32, i32, i32
  }
  func.func @transform_1(%arg0: i32) -> (i32, i32) {
    %c0_i32 = arith.constant 0 : i32
    %c0_i32_0 = arith.constant 0 : i32
    %c0_i32_1 = arith.constant 0 : i32
    return %c0_i32, %c0_i32_0 : i32, i32
  }
  func.func @transform_2(%arg0: i32) -> (i32, i32) {
    %c0_i32 = arith.constant 0 : i32
    %c0_i32_0 = arith.constant 0 : i32
    %c0_i32_1 = arith.constant 0 : i32
    return %c0_i32, %c0_i32_0 : i32, i32
  }
  func.func @transform_3(%arg0: i32) -> (i32, i32) {
    %c0_i32 = arith.constant 0 : i32
    %c0_i32_0 = arith.constant 0 : i32
    %c0_i32_1 = arith.constant 0 : i32
    return %c0_i32, %c0_i32_0 : i32, i32
  }
  func.func @transform_4(%arg0: i32) -> (i32, i32) {
    %c0_i32 = arith.constant 0 : i32
    %c0_i32_0 = arith.constant 0 : i32
    %c0_i32_1 = arith.constant 0 : i32
    return %c0_i32, %c0_i32_0 : i32, i32
  }
  func.func @transform_5(%arg0: i32) -> (i32, i32) {
    %c0_i32 = arith.constant 0 : i32
    %c0_i32_0 = arith.constant 0 : i32
    %c0_i32_1 = arith.constant 0 : i32
    return %c0_i32, %c0_i32_0 : i32, i32
  }
  func.func @transform_6(%arg0: i32) -> (i32, i32) {
    %c0_i32 = arith.constant 0 : i32
    %c0_i32_0 = arith.constant 0 : i32
    %c0_i32_1 = arith.constant 0 : i32
    return %c0_i32, %c0_i32_0 : i32, i32
  }
  func.func @transform_7(%arg0: i32) -> (i32, i32) {
    %c0_i32 = arith.constant 0 : i32
    %c0_i32_0 = arith.constant 0 : i32
    %c0_i32_1 = arith.constant 0 : i32
    return %c0_i32, %c0_i32_0 : i32, i32
  }
  func.func @transform_8(%arg0: i32) -> (i32, i32) {
    %c0_i32 = arith.constant 0 : i32
    %c0_i32_0 = arith.constant 0 : i32
    %c0_i32_1 = arith.constant 0 : i32
    return %c0_i32, %c0_i32_0 : i32, i32
  }
  func.func @transform_9(%arg0: i32) -> (i32, i32, i32) {
    %c0_i32 = arith.constant 0 : i32
    %c0_i32_0 = arith.constant 0 : i32
    %c0_i32_1 = arith.constant 0 : i32
    return %arg0, %c0_i32, %c0_i32_0 : i32, i32, i32
  }
  func.func @transform_10(%arg0: i32) -> (i32, i32, i32) {
    %c0_i32 = arith.constant 0 : i32
    %c0_i32_0 = arith.constant 0 : i32
    %c0_i32_1 = arith.constant 0 : i32
    return %arg0, %c0_i32, %c0_i32_0 : i32, i32, i32
  }
}

</mosaic_0001>

<llo_original>
// kernel: tpu_custom_call.1
$region0: #{tpu_custom_call.1}
  #allocation0 [shape = 'u32[]', space=smem, size = 0x4, offset = 0x4, fixed_abs, tag = 'smem constant byte address 0x4 - core index']
  #allocation1 [shape = 'u32[72,128]{1,0:T(1,128)}', space=vmem, size = 0x9000, scoped, tag = 'internal scratch']
  %s0 = inlined_call_operand.vmem [shape: f32[2,32,4], index: 0, kind: input, shape index: {}]
  %s1 = inlined_call_operand.vmem [shape: f32[20,128], index: 1, kind: input, shape index: {}]
  %s2 = inlined_call_operand.vmem [shape: f32[1,128], index: 2, kind: input, shape index: {}]
  %s3 = inlined_call_operand.vmem [shape: f32[1,128], index: 3, kind: input, shape index: {}]
  %s4 = inlined_call_operand.hbm [shape: f32[640,128], index: 4, kind: input, shape index: {}]
  %s5 = inlined_call_operand.vmem [shape: f32[1,128], index: 5, kind: input, shape index: {}]
  %s6 = inlined_call_operand.vmem [shape: f32[1,128], index: 6, kind: input, shape index: {}]
  %s7 = inlined_call_operand.hbm [shape: f32[128,128], index: 7, kind: input, shape index: {}]
  %s8 = inlined_call_operand.vmem [shape: f32[1,128], index: 8, kind: input, shape index: {}]
  %s9 = inlined_call_operand.vmem [shape: f32[2,5,128], index: 9, kind: output, shape index: {0}]
  %s10 = inlined_call_operand.vmem [shape: f32[2,5,128], index: 10, kind: output, shape index: {1}]
  %11 = xla_tuple %s9, %s10
  %s12 = sld [smem:[#allocation0]]
  $region62: #{tpu_custom_call.1} parent=0
    _
  %s14 = ssub.s32 1, %s12
  %s15 = scalar_select 0, %s14, %s12
  $region1: #{tpu_custom_call.1} parent=0
    #allocation2 [shape = 'u8[327680]{0}', space=vmem, size = 0x50000, scoped, tag = 'input window, operand 4, single buffered']
    #allocation3 [shape = 's32[1]{0}', space=sflag, size = 0x4, scoped, tag = 'scoped memory for tpu_custom_call.1']
    #allocation4 [shape = 'u8[65536]{0}', space=vmem, size = 0x10000, scoped, tag = 'input window, operand 7, single buffered']
    #allocation5 [shape = 's32[1]{0}', space=sflag, size = 0x4, scoped, tag = 'scoped memory for tpu_custom_call.1']
    %16 = vsyncpa [#allocation3], 0
    %17 = vsyncpa [#allocation5], 0
    // Predicated region
    $region2: #{tpu_custom_call.1} parent=1 // pred_check
      _
    $region3: #{tpu_custom_call.1} parent=1 // pred_check_branch
      %19 = sbr.rel (0) target = $region5
    $region4: #{tpu_custom_call.1} parent=1 // pred_region
      _
    $region5: #{tpu_custom_call.1} parent=1 // pred_fallthru
      _
    // Predicated region
    $region6: #{tpu_custom_call.1} parent=1 // pred_check
      _
    $region7: #{tpu_custom_call.1} parent=1 // pred_check_branch
      %21 = sbr.rel (0) target = $region9
    $region8: #{tpu_custom_call.1} parent=1 // pred_region
      _
    $region9: #{tpu_custom_call.1} parent=1 // pred_fallthru
      _
    // Predicated region
    $region10: #{tpu_custom_call.1} parent=1 // pred_check
      _
    $region11: #{tpu_custom_call.1} parent=1 // pred_check_branch
      %23 = sbr.rel (0) target = $region13
    $region12: #{tpu_custom_call.1} parent=1 // pred_region
      _
    $region13: #{tpu_custom_call.1} parent=1 // pred_fallthru
      _
    // Predicated region
    $region14: #{tpu_custom_call.1} parent=1 // pred_check
      _
    $region15: #{tpu_custom_call.1} parent=1 // pred_check_branch
      %25 = sbr.rel (0) target = $region17
    $region16: #{tpu_custom_call.1} parent=1 // pred_region
      _
    $region17: #{tpu_custom_call.1} parent=1 // pred_fallthru
      _
    // Predicated region
    $region18: #{tpu_custom_call.1} parent=1 // pred_check
      _
    $region19: #{tpu_custom_call.1} parent=1 // pred_check_branch
      %27 = sbr.rel (0) target = $region21
    $region20: #{tpu_custom_call.1} parent=1 // pred_region
      %29 = vsyncadd [#allocation3], 0
      %s30 = sshll.u32 %s4, 4
      %s31 = int_to_ptr.hbm [resolvable:$true] %s30
      %s32 = sshll.u32 [#allocation2], 4
      %s33 = int_to_ptr.vmem [resolvable:$true] %s32
      %38 = dma.hbm_to_vmem [thread:$0]  %s31, 10240, %s33, [#allocation3], 128, 128, 8
    $region21: #{tpu_custom_call.1} parent=1 // pred_fallthru
      _
    // Predicated region
    $region22: #{tpu_custom_call.1} parent=1 // pred_check
      _
    $region23: #{tpu_custom_call.1} parent=1 // pred_check_branch
      %40 = sbr.rel (0) target = $region25
    $region24: #{tpu_custom_call.1} parent=1 // pred_region
      _
    $region25: #{tpu_custom_call.1} parent=1 // pred_fallthru
      _
    // Predicated region
    $region26: #{tpu_custom_call.1} parent=1 // pred_check
      _
    $region27: #{tpu_custom_call.1} parent=1 // pred_check_branch
      %42 = sbr.rel (0) target = $region29
    $region28: #{tpu_custom_call.1} parent=1 // pred_region
      _
    $region29: #{tpu_custom_call.1} parent=1 // pred_fallthru
      _
    // Predicated region
    $region30: #{tpu_custom_call.1} parent=1 // pred_check
      _
    $region31: #{tpu_custom_call.1} parent=1 // pred_check_branch
      %44 = sbr.rel (0) target = $region33
    $region32: #{tpu_custom_call.1} parent=1 // pred_region
      %46 = vsyncadd [#allocation5], 0
      %s47 = sshll.u32 %s7, 4
      %s48 = int_to_ptr.hbm [resolvable:$true] %s47
      %s49 = sshll.u32 [#allocation4], 4
      %s50 = int_to_ptr.vmem [resolvable:$true] %s49
      %55 = dma.hbm_to_vmem [thread:$0]  %s48, 2048, %s50, [#allocation5], 128, 128, 8
    $region33: #{tpu_custom_call.1} parent=1 // pred_fallthru
      _
    // Predicated region
    $region34: #{tpu_custom_call.1} parent=1 // pred_check
      _
    $region35: #{tpu_custom_call.1} parent=1 // pred_check_branch
      %57 = sbr.rel (0) target = $region37
    $region36: #{tpu_custom_call.1} parent=1 // pred_region
      _
    $region37: #{tpu_custom_call.1} parent=1 // pred_fallthru
      _
    // Predicated region
    $region38: #{tpu_custom_call.1} parent=1 // pred_check
      _
    $region39: #{tpu_custom_call.1} parent=1 // pred_check_branch
      %59 = sbr.rel (0) target = $region41
    $region40: #{tpu_custom_call.1} parent=1 // pred_region
      %61 = dma.done [#allocation3], 10240
    $region41: #{tpu_custom_call.1} parent=1 // pred_fallthru
      _
    // Predicated region
    $region42: #{tpu_custom_call.1} parent=1 // pred_check
      _
    $region43: #{tpu_custom_call.1} parent=1 // pred_check_branch
      %63 = sbr.rel (0) target = $region45
    $region44: #{tpu_custom_call.1} parent=1 // pred_region
      %65 = dma.done [#allocation5], 2048
    $region45: #{tpu_custom_call.1} parent=1 // pred_fallthru
      _
    %v66 = vld [vmem:[%s1] sm:$0xff]
    %v67 = vld [vmem:[%s1 + $0x8] sm:$0xff]
    %v68 = vld [vmem:[%s1 + $0x10] sm:$0xf]
    %v69 = vld [vmem:[#allocation2] sm:$0xff]
    %v70 = vld [vmem:[#allocation2 + $0x8] sm:$0xff]
    %v71 = vld [vmem:[#allocation2 + $0x10] sm:$0xff]
    %v72 = vld [vmem:[#allocation2 + $0x18] sm:$0xff]
    %v73 = vld [vmem:[#allocation2 + $0x20] sm:$0xff]
    %v74 = vld [vmem:[#allocation2 + $0x28] sm:$0xff]
    %v75 = vld [vmem:[#allocation2 + $0x30] sm:$0xff]
    %v76 = vld [vmem:[#allocation2 + $0x38] sm:$0xff]
    %v77 = vld [vmem:[#allocation2 + $0x40] sm:$0xff]
    %v78 = vld [vmem:[#allocation2 + $0x48] sm:$0xff]
    %v79 = vld [vmem:[#allocation2 + $0x50] sm:$0xff]
    %v80 = vld [vmem:[#allocation2 + $0x58] sm:$0xff]
    %v81 = vld [vmem:[#allocation2 + $0x60] sm:$0xff]
    %v82 = vld [vmem:[#allocation2 + $0x68] sm:$0xff]
    %v83 = vld [vmem:[#allocation2 + $0x70] sm:$0xff]
    %v84 = vld [vmem:[#allocation2 + $0x78] sm:$0xff]
    %v85 = vld [vmem:[#allocation2 + $0x80] sm:$0xff]
    %v86 = vld [vmem:[#allocation2 + $0x88] sm:$0xff]
    %v87 = vld [vmem:[#allocation2 + $0x90] sm:$0xff]
    %v88 = vld [vmem:[#allocation2 + $0x98] sm:$0xff]
    %v89 = vld [vmem:[#allocation2 + $0xa0] sm:$0xff]
    %v90 = vld [vmem:[#allocation2 + $0xa8] sm:$0xff]
    %v91 = vld [vmem:[#allocation2 + $0xb0] sm:$0xff]
    %v92 = vld [vmem:[#allocation2 + $0xb8] sm:$0xff]
    %v93 = vld [vmem:[#allocation2 + $0xc0] sm:$0xff]
    %v94 = vld [vmem:[#allocation2 + $0xc8] sm:$0xff]
    %v95 = vld [vmem:[#allocation2 + $0xd0] sm:$0xff]
    %v96 = vld [vmem:[#allocation2 + $0xd8] sm:$0xff]
    %v97 = vld [vmem:[#allocation2 + $0xe0] sm:$0xff]
    %v98 = vld [vmem:[#allocation2 + $0xe8] sm:$0xff]
    %v99 = vld [vmem:[#allocation2 + $0xf0] sm:$0xff]
    %v100 = vld [vmem:[#allocation2 + $0xf8] sm:$0xff]
    %v101 = vld [vmem:[#allocation2 + $0x100] sm:$0xff]
    %v102 = vld [vmem:[#allocation2 + $0x108] sm:$0xff]
    %v103 = vld [vmem:[#allocation2 + $0x110] sm:$0xff]
    %v104 = vld [vmem:[#allocation2 + $0x118] sm:$0xff]
    %v105 = vld [vmem:[#allocation2 + $0x120] sm:$0xff]
    %v106 = vld [vmem:[#allocation2 + $0x128] sm:$0xff]
    %v107 = vld [vmem:[#allocation2 + $0x130] sm:$0xff]
    %v108 = vld [vmem:[#allocation2 + $0x138] sm:$0xff]
    %v109 = vld [vmem:[#allocation2 + $0x140] sm:$0xff]
    %v110 = vld [vmem:[#allocation2 + $0x148] sm:$0xff]
    %v111 = vld [vmem:[#allocation2 + $0x150] sm:$0xff]
    %v112 = vld [vmem:[#allocation2 + $0x158] sm:$0xff]
    %v113 = vld [vmem:[#allocation2 + $0x160] sm:$0xff]
    %v114 = vld [vmem:[#allocation2 + $0x168] sm:$0xff]
    %v115 = vld [vmem:[#allocation2 + $0x170] sm:$0xff]
    %v116 = vld [vmem:[#allocation2 + $0x178] sm:$0xff]
    %v117 = vld [vmem:[#allocation2 + $0x180] sm:$0xff]
    %v118 = vld [vmem:[#allocation2 + $0x188] sm:$0xff]
    %v119 = vld [vmem:[#allocation2 + $0x190] sm:$0xff]
    %v120 = vld [vmem:[#allocation2 + $0x198] sm:$0xff]
    %v121 = vld [vmem:[#allocation2 + $0x1a0] sm:$0xff]
    %v122 = vld [vmem:[#allocation2 + $0x1a8] sm:$0xff]
    %v123 = vld [vmem:[#allocation2 + $0x1b0] sm:$0xff]
    %v124 = vld [vmem:[#allocation2 + $0x1b8] sm:$0xff]
    %v125 = vld [vmem:[#allocation2 + $0x1c0] sm:$0xff]
    %v126 = vld [vmem:[#allocation2 + $0x1c8] sm:$0xff]
    %v127 = vld [vmem:[#allocation2 + $0x1d0] sm:$0xff]
    %v128 = vld [vmem:[#allocation2 + $0x1d8] sm:$0xff]
    %v129 = vld [vmem:[#allocation2 + $0x1e0] sm:$0xff]
    %v130 = vld [vmem:[#allocation2 + $0x1e8] sm:$0xff]
    %v131 = vld [vmem:[#allocation2 + $0x1f0] sm:$0xff]
    %v132 = vld [vmem:[#allocation2 + $0x1f8] sm:$0xff]
    %v133 = vld [vmem:[#allocation2 + $0x200] sm:$0xff]
    %v134 = vld [vmem:[#allocation2 + $0x208] sm:$0xff]
    %v135 = vld [vmem:[#allocation2 + $0x210] sm:$0xff]
    %v136 = vld [vmem:[#allocation2 + $0x218] sm:$0xff]
    %v137 = vld [vmem:[#allocation2 + $0x220] sm:$0xff]
    %v138 = vld [vmem:[#allocation2 + $0x228] sm:$0xff]
    %v139 = vld [vmem:[#allocation2 + $0x230] sm:$0xff]
    %v140 = vld [vmem:[#allocation2 + $0x238] sm:$0xff]
    %v141 = vld [vmem:[#allocation2 + $0x240] sm:$0xff]
    %v142 = vld [vmem:[#allocation2 + $0x248] sm:$0xff]
    %v143 = vld [vmem:[#allocation2 + $0x250] sm:$0xff]
    %v144 = vld [vmem:[#allocation2 + $0x258] sm:$0xff]
    %v145 = vld [vmem:[#allocation2 + $0x260] sm:$0xff]
    %v146 = vld [vmem:[#allocation2 + $0x268] sm:$0xff]
    %v147 = vld [vmem:[#allocation2 + $0x270] sm:$0xff]
    %v148 = vld [vmem:[#allocation2 + $0x278] sm:$0xff]
    %v149 = vld [vmem:[#allocation4] sm:$0xff]
    %v150 = vld [vmem:[#allocation4 + $0x8] sm:$0xff]
    %v151 = vld [vmem:[#allocation4 + $0x10] sm:$0xff]
    %v152 = vld [vmem:[#allocation4 + $0x18] sm:$0xff]
    %v153 = vld [vmem:[#allocation4 + $0x20] sm:$0xff]
    %v154 = vld [vmem:[#allocation4 + $0x28] sm:$0xff]
    %v155 = vld [vmem:[#allocation4 + $0x30] sm:$0xff]
    %v156 = vld [vmem:[#allocation4 + $0x38] sm:$0xff]
    %v157 = vld [vmem:[#allocation4 + $0x40] sm:$0xff]
    %v158 = vld [vmem:[#allocation4 + $0x48] sm:$0xff]
    %v159 = vld [vmem:[#allocation4 + $0x50] sm:$0xff]
    %v160 = vld [vmem:[#allocation4 + $0x58] sm:$0xff]
    %v161 = vld [vmem:[#allocation4 + $0x60] sm:$0xff]
    %v162 = vld [vmem:[#allocation4 + $0x68] sm:$0xff]
    %v163 = vld [vmem:[#allocation4 + $0x70] sm:$0xff]
    %v164 = vld [vmem:[#allocation4 + $0x78] sm:$0xff]
    %v165 = vld [vmem:[%s2] sm:$0x1]
    %v166 = vld [vmem:[%s3] sm:$0x1]
    %v167 = vld [vmem:[%s5] sm:$0x1]
    %v168 = vld [vmem:[%s6] sm:$0x1]
    %v169 = vld [vmem:[%s8] sm:$0x1]
    %v170 = vld [vmem:[%s0] sm:$0xff]
    %v171 = vld [vmem:[%s0 + $0x8] sm:$0xff]
    %v172 = vld [vmem:[%s0 + $0x10] sm:$0xff]
    %v173 = vld [vmem:[%s0 + $0x18] sm:$0xff]
    %vm178 = vcmask 1046528
    %v179 = vrot.slane %v170, 1
    %v180 = vrot.slane %v171, 1
    %v181 = vsel %vm178, %v179, %v180
    %v182 = vrot.slane %v172, 1
    %v183 = vsel %vm178, %v180, %v182
    %v184 = vrot.slane %v173, 1
    %v185 = vsel %vm178, %v182, %v184
    %v187 = vrot.slane %v66, 4
    %vm188 = vcmask 31744
    %v189 = vsel %vm188, %v181, 0
    %v191 = vsel %vm188, %v183, 0
    %v193 = vsel %vm188, %v185, 0
    %v195 = vsel %vm188, %v184, 0
    %vm197 = vcmask 1043456
    %v198 = vsel %vm197, %v187, 0
    %200 = vmatpush.msra.mxu0 0.0
    %201 = vmatpush.msra.mxu0 0.0
    %202 = vmatpush.msra.mxu0 0.0
    %203 = vmatpush.msra.mxu0 0.0
    %204 = vmatpush.msra.mxu0 0.0
    %205 = vmatpush.msra.mxu0 0.0
    %206 = vmatpush.msra.mxu0 0.0
    %207 = vmatpush.msra.mxu0 0.0
    %208 = vmatpush.msra.mxu0 0.0
    %209 = vmatpush.msra.mxu0 0.0
    %210 = vmatpush.msra.mxu0 0.0
    %211 = vmatpush.msra.mxu0 0.0
    %212 = vmatpush.msra.mxu0 0.0
    %213 = vmatpush.msra.mxu0 0.0
    %214 = vmatpush.msra.mxu0 0.0
    %215 = vmatpush.msra.mxu0 %v198
    %216 = vmatmul.f32.gmra.mxu0 %v189
    %v217 = vpop.f32.mrf.mxu0
    %v218 = vadd.f32 0.0, %v217
    %219 = vmatmul.f32.gmra.mxu0 %v191
    %v220 = vpop.f32.mrf.mxu0
    %v221 = vadd.f32 0.0, %v220
    %222 = vmatmul.f32.gmra.mxu0 %v193
    %v223 = vpop.f32.mrf.mxu0
    %v224 = vadd.f32 0.0, %v223
    %225 = vmatmul.f32.gmra.mxu0 %v195
    %v226 = vpop.f32.mrf.mxu0
    %v227 = vadd.f32 0.0, %v226
    %228 = vdwg.mxu0
    %v229 = vsel %vm188, %v170, 0
    %v231 = vsel %vm188, %v171, 0
    %v233 = vsel %vm188, %v172, 0
    %v235 = vsel %vm188, %v173, 0
    %v237 = vsel %vm197, %v66, 0
    %239 = vmatpush.msra.mxu0 0.0
    %240 = vmatpush.msra.mxu0 0.0
    %241 = vmatpush.msra.mxu0 0.0
    %242 = vmatpush.msra.mxu0 0.0
    %243 = vmatpush.msra.mxu0 0.0
    %244 = vmatpush.msra.mxu0 0.0
    %245 = vmatpush.msra.mxu0 0.0
    %246 = vmatpush.msra.mxu0 0.0
    %247 = vmatpush.msra.mxu0 0.0
    %248 = vmatpush.msra.mxu0 0.0
    %249 = vmatpush.msra.mxu0 0.0
    %250 = vmatpush.msra.mxu0 0.0
    %251 = vmatpush.msra.mxu0 0.0
    %252 = vmatpush.msra.mxu0 0.0
    %253 = vmatpush.msra.mxu0 0.0
    %254 = vmatpush.msra.mxu0 %v237
    %255 = vmatmul.f32.gmra.mxu0 %v229
    %v256 = vpop.f32.mrf.mxu0
    %v257 = vadd.f32 %v218, %v256
    %258 = vmatmul.f32.gmra.mxu0 %v231
    %v259 = vpop.f32.mrf.mxu0
    %v260 = vadd.f32 %v221, %v259
    %261 = vmatmul.f32.gmra.mxu0 %v233
    %v262 = vpop.f32.mrf.mxu0
    %v263 = vadd.f32 %v224, %v262
    %264 = vmatmul.f32.gmra.mxu0 %v235
    %v265 = vpop.f32.mrf.mxu0
    %v266 = vadd.f32 %v227, %v265
    %267 = vdwg.mxu0
    %vm268 = vcmask 1045504
    %v269 = vrot.slane %v170, 2
    %v270 = vrot.slane %v171, 2
    %v271 = vsel %vm268, %v269, %v270
    %v272 = vrot.slane %v172, 2
    %v273 = vsel %vm268, %v270, %v272
    %v274 = vrot.slane %v173, 2
    %v275 = vsel %vm268, %v272, %v274
    %v276 = vsel %vm188, %v271, 0
    %v278 = vsel %vm188, %v273, 0
    %v280 = vsel %vm188, %v275, 0
    %v282 = vsel %vm188, %v274, 0
    %v285 = vsel %vm197, %v67, 0
    %287 = vmatpush.msra.mxu0 0.0
    %288 = vmatpush.msra.mxu0 0.0
    %289 = vmatpush.msra.mxu0 0.0
    %290 = vmatpush.msra.mxu0 0.0
    %291 = vmatpush.msra.mxu0 0.0
    %292 = vmatpush.msra.mxu0 0.0
    %293 = vmatpush.msra.mxu0 0.0
    %294 = vmatpush.msra.mxu0 0.0
    %295 = vmatpush.msra.mxu0 0.0
    %296 = vmatpush.msra.mxu0 0.0
    %297 = vmatpush.msra.mxu0 0.0
    %298 = vmatpush.msra.mxu0 0.0
    %299 = vmatpush.msra.mxu0 0.0
    %300 = vmatpush.msra.mxu0 0.0
    %301 = vmatpush.msra.mxu0 0.0
    %302 = vmatpush.msra.mxu0 %v285
    %303 = vmatmul.f32.gmra.mxu0 %v276
    %v304 = vpop.f32.mrf.mxu0
    %v305 = vadd.f32 0.0, %v304
    %306 = vmatmul.f32.gmra.mxu0 %v278
    %v307 = vpop.f32.mrf.mxu0
    %v308 = vadd.f32 0.0, %v307
    %309 = vmatmul.f32.gmra.mxu0 %v280
    %v310 = vpop.f32.mrf.mxu0
    %v311 = vadd.f32 0.0, %v310
    %312 = vmatmul.f32.gmra.mxu0 %v282
    %v313 = vpop.f32.mrf.mxu0
    %v314 = vadd.f32 0.0, %v313
    %315 = vdwg.mxu0
    %v316 = vadd.f32 %v257, %v305
    %v317 = vadd.f32 %v260, %v308
    %v318 = vadd.f32 %v263, %v311
    %v319 = vadd.f32 %v266, %v314
    %vm320 = vcmask 1044480
    %v321 = vrot.slane %v170, 3
    %v322 = vrot.slane %v171, 3
    %v323 = vsel %vm320, %v321, %v322
    %v324 = vrot.slane %v172, 3
    %v325 = vsel %vm320, %v322, %v324
    %v326 = vrot.slane %v173, 3
    %v327 = vsel %vm320, %v324, %v326
    %v328 = vrot.slane %v67, 4
    %v329 = vsel %vm188, %v323, 0
    %v331 = vsel %vm188, %v325, 0
    %v333 = vsel %vm188, %v327, 0
    %v335 = vsel %vm188, %v326, 0
    %v337 = vsel %vm197, %v328, 0
    %339 = vmatpush.msra.mxu0 0.0
    %340 = vmatpush.msra.mxu0 0.0
    %341 = vmatpush.msra.mxu0 0.0
    %342 = vmatpush.msra.mxu0 0.0
    %343 = vmatpush.msra.mxu0 0.0
    %344 = vmatpush.msra.mxu0 0.0
    %345 = vmatpush.msra.mxu0 0.0
    %346 = vmatpush.msra.mxu0 0.0
    %347 = vmatpush.msra.mxu0 0.0
    %348 = vmatpush.msra.mxu0 0.0
    %349 = vmatpush.msra.mxu0 0.0
    %350 = vmatpush.msra.mxu0 0.0
    %351 = vmatpush.msra.mxu0 0.0
    %352 = vmatpush.msra.mxu0 0.0
    %353 = vmatpush.msra.mxu0 0.0
    %354 = vmatpush.msra.mxu0 %v337
    %355 = vmatmul.f32.gmra.mxu0 %v329
    %v356 = vpop.f32.mrf.mxu0
    %v357 = vadd.f32 0.0, %v356
    %358 = vmatmul.f32.gmra.mxu0 %v331
    %v359 = vpop.f32.mrf.mxu0
    %v360 = vadd.f32 0.0, %v359
    %361 = vmatmul.f32.gmra.mxu0 %v333
    %v362 = vpop.f32.mrf.mxu0
    %v363 = vadd.f32 0.0, %v362
    %364 = vmatmul.f32.gmra.mxu0 %v335
    %v365 = vpop.f32.mrf.mxu0
    %v366 = vadd.f32 0.0, %v365
    %367 = vdwg.mxu0
    %v368 = vadd.f32 %v316, %v357
    %v369 = vadd.f32 %v317, %v360
    %v370 = vadd.f32 %v318, %v363
    %v371 = vadd.f32 %v319, %v366
    %v372 = vrot.slane %v170, 4
    %v373 = vrot.slane %v171, 4
    %v374 = vsel %vm197, %v372, %v373
    %v375 = vrot.slane %v172, 4
    %v376 = vsel %vm197, %v373, %v375
    %v377 = vrot.slane %v173, 4
    %v378 = vsel %vm197, %v375, %v377
    %v379 = vsel %vm188, %v374, 0
    %v381 = vsel %vm188, %v376, 0
    %v383 = vsel %vm188, %v378, 0
    %v385 = vsel %vm188, %v377, 0
    %v388 = vsel %vm197, %v68, 0
    %390 = vmatpush.msra.mxu0 0.0
    %391 = vmatpush.msra.mxu0 0.0
    %392 = vmatpush.msra.mxu0 0.0
    %393 = vmatpush.msra.mxu0 0.0
    %394 = vmatpush.msra.mxu0 0.0
    %395 = vmatpush.msra.mxu0 0.0
    %396 = vmatpush.msra.mxu0 0.0
    %397 = vmatpush.msra.mxu0 0.0
    %398 = vmatpush.msra.mxu0 0.0
    %399 = vmatpush.msra.mxu0 0.0
    %400 = vmatpush.msra.mxu0 0.0
    %401 = vmatpush.msra.mxu0 0.0
    %402 = vmatpush.msra.mxu0 0.0
    %403 = vmatpush.msra.mxu0 0.0
    %404 = vmatpush.msra.mxu0 0.0
    %405 = vmatpush.msra.mxu0 %v388
    %406 = vmatmul.f32.gmra.mxu0 %v379
    %v407 = vpop.f32.mrf.mxu0
    %v408 = vadd.f32 0.0, %v407
    %409 = vmatmul.f32.gmra.mxu0 %v381
    %v410 = vpop.f32.mrf.mxu0
    %v411 = vadd.f32 0.0, %v410
    %412 = vmatmul.f32.gmra.mxu0 %v383
    %v413 = vpop.f32.mrf.mxu0
    %v414 = vadd.f32 0.0, %v413
    %415 = vmatmul.f32.gmra.mxu0 %v385
    %v416 = vpop.f32.mrf.mxu0
    %v417 = vadd.f32 0.0, %v416
    %418 = vdwg.mxu0
    %v419 = vadd.f32 %v368, %v408
    %v420 = vadd.f32 %v369, %v411
    %v421 = vadd.f32 %v370, %v414
    %v422 = vadd.f32 %v371, %v417
    %v424 = vperm.slane %v165, 0
    %v426 = vmul.f32 %v419, %v424
    %v427 = vmul.f32 %v420, %v424
    %v428 = vmul.f32 %v421, %v424
    %v429 = vmul.f32 %v422, %v424
    %v431 = vperm.slane %v166, 0
    %v433 = vadd.f32 %v426, %v431
    %v434 = vadd.f32 %v427, %v431
    %v435 = vadd.f32 %v428, %v431
    %v436 = vadd.f32 %v429, %v431
    %v437 = vmax.f32 %v433, 0.0
    %v438 = vmax.f32 %v434, 0.0
    %v439 = vmax.f32 %v435, 0.0
    %v440 = vmax.f32 %v436, 0.0
    %v445 = vrot.slane %v437, 2
    %v446 = vrot.slane %v437, 4
    %v447 = vrot.slane %v437, 6
    %v448 = vrot.slane %v438, 2
    %v449 = vrot.slane %v438, 4
    %v450 = vrot.slane %v438, 6
    %v451 = vrot.slane %v439, 2
    %v452 = vrot.slane %v439, 4
    %v453 = vrot.slane %v439, 6
    %v454 = vrot.slane %v440, 2
    %vm465 = vcmask 1041408
    %v466 = vsel %vm465, %v437, -inf
    %v467 = vrot.slane %v466, 4
    %v468 = vmax.f32 %v466, %v467
    %v469 = vrot.slane %v468, 2
    %v470 = vmax.f32 %v468, %v469
    %v471 = vrot.slane %v470, 1
    %v472 = vmax.f32 %v470, %v471
    %v473 = vsel %vm465, %v445, -inf
    %v474 = vrot.slane %v473, 4
    %v475 = vmax.f32 %v473, %v474
    %v476 = vrot.slane %v475, 2
    %v477 = vmax.f32 %v475, %v476
    %v478 = vrot.slane %v477, 1
    %v479 = vmax.f32 %v477, %v478
    %v480 = vsel %vm465, %v446, -inf
    %v481 = vrot.slane %v480, 4
    %v482 = vmax.f32 %v480, %v481
    %v483 = vrot.slane %v482, 2
    %v484 = vmax.f32 %v482, %v483
    %v485 = vrot.slane %v484, 1
    %v486 = vmax.f32 %v484, %v485
    %v487 = vsel %vm465, %v447, -inf
    %v488 = vrot.slane %v487, 4
    %v489 = vmax.f32 %v487, %v488
    %v490 = vrot.slane %v489, 2
    %v491 = vmax.f32 %v489, %v490
    %v492 = vrot.slane %v491, 1
    %v493 = vmax.f32 %v491, %v492
    %v494 = vsel %vm465, %v438, -inf
    %v495 = vrot.slane %v494, 4
    %v496 = vmax.f32 %v494, %v495
    %v497 = vrot.slane %v496, 2
    %v498 = vmax.f32 %v496, %v497
    %v499 = vrot.slane %v498, 1
    %v500 = vmax.f32 %v498, %v499
    %v501 = vsel %vm465, %v448, -inf
    %v502 = vrot.slane %v501, 4
    %v503 = vmax.f32 %v501, %v502
    %v504 = vrot.slane %v503, 2
    %v505 = vmax.f32 %v503, %v504
    %v506 = vrot.slane %v505, 1
    %v507 = vmax.f32 %v505, %v506
    %v508 = vsel %vm465, %v449, -inf
    %v509 = vrot.slane %v508, 4
    %v510 = vmax.f32 %v508, %v509
    %v511 = vrot.slane %v510, 2
    %v512 = vmax.f32 %v510, %v511
    %v513 = vrot.slane %v512, 1
    %v514 = vmax.f32 %v512, %v513
    %v515 = vsel %vm465, %v450, -inf
    %v516 = vrot.slane %v515, 4
    %v517 = vmax.f32 %v515, %v516
    %v518 = vrot.slane %v517, 2
    %v519 = vmax.f32 %v517, %v518
    %v520 = vrot.slane %v519, 1
    %v521 = vmax.f32 %v519, %v520
    %v522 = vsel %vm465, %v439, -inf
    %v523 = vrot.slane %v522, 4
    %v524 = vmax.f32 %v522, %v523
    %v525 = vrot.slane %v524, 2
    %v526 = vmax.f32 %v524, %v525
    %v527 = vrot.slane %v526, 1
    %v528 = vmax.f32 %v526, %v527
    %v529 = vsel %vm465, %v451, -inf
    %v530 = vrot.slane %v529, 4
    %v531 = vmax.f32 %v529, %v530
    %v532 = vrot.slane %v531, 2
    %v533 = vmax.f32 %v531, %v532
    %v534 = vrot.slane %v533, 1
    %v535 = vmax.f32 %v533, %v534
    %v536 = vsel %vm465, %v452, -inf
    %v537 = vrot.slane %v536, 4
    %v538 = vmax.f32 %v536, %v537
    %v539 = vrot.slane %v538, 2
    %v540 = vmax.f32 %v538, %v539
    %v541 = vrot.slane %v540, 1
    %v542 = vmax.f32 %v540, %v541
    %v543 = vsel %vm465, %v453, -inf
    %v544 = vrot.slane %v543, 4
    %v545 = vmax.f32 %v543, %v544
    %v546 = vrot.slane %v545, 2
    %v547 = vmax.f32 %v545, %v546
    %v548 = vrot.slane %v547, 1
    %v549 = vmax.f32 %v547, %v548
    %v550 = vsel %vm465, %v440, -inf
    %v551 = vrot.slane %v550, 4
    %v552 = vmax.f32 %v550, %v551
    %v553 = vrot.slane %v552, 2
    %v554 = vmax.f32 %v552, %v553
    %v555 = vrot.slane %v554, 1
    %v556 = vmax.f32 %v554, %v555
    %v557 = vsel %vm465, %v454, -inf
    %v558 = vrot.slane %v557, 4
    %v559 = vmax.f32 %v557, %v558
    %v560 = vrot.slane %v559, 2
    %v561 = vmax.f32 %v559, %v560
    %v562 = vrot.slane %v561, 1
    %v563 = vmax.f32 %v561, %v562
    %vm574 = vcmask 1041409
    %v575 = vsel %vm574, %v479, %v472
    %vm576 = vcmask 1042434
    %v577 = vsel %vm576, %v486, %v575
    %vm578 = vcmask 1043459
    %v579 = vsel %vm578, %v493, %v577
    %vm580 = vcmask 1044484
    %v581 = vsel %vm580, %v500, %v579
    %vm582 = vcmask 1045509
    %v583 = vsel %vm582, %v507, %v581
    %vm584 = vcmask 1046534
    %v585 = vsel %vm584, %v514, %v583
    %vm586 = vcmask 1047559
    %v587 = vsel %vm586, %v521, %v585
    %v588 = vsel %vm574, %v535, %v528
    %v592 = vsel %vm574, %v486, %v479
    %v593 = vsel %vm576, %v493, %v592
    %v594 = vsel %vm578, %v500, %v593
    %v595 = vsel %vm580, %v507, %v594
    %v596 = vsel %vm582, %v514, %v595
    %v597 = vsel %vm584, %v521, %v596
    %v598 = vsel %vm586, %v528, %v597
    %v599 = vsel %vm574, %v542, %v535
    %v603 = vsel %vm574, %v493, %v486
    %v604 = vsel %vm576, %v500, %v603
    %v605 = vsel %vm578, %v507, %v604
    %v606 = vsel %vm580, %v514, %v605
    %v607 = vsel %vm582, %v521, %v606
    %v608 = vsel %vm584, %v528, %v607
    %v609 = vsel %vm586, %v535, %v608
    %v610 = vsel %vm574, %v549, %v542
    %v614 = vsel %vm574, %v500, %v493
    %v615 = vsel %vm576, %v507, %v614
    %v616 = vsel %vm578, %v514, %v615
    %v617 = vsel %vm580, %v521, %v616
    %v618 = vsel %vm582, %v528, %v617
    %v619 = vsel %vm584, %v535, %v618
    %v620 = vsel %vm586, %v542, %v619
    %v621 = vsel %vm574, %v556, %v549
    %v625 = vsel %vm574, %v507, %v500
    %v626 = vsel %vm576, %v514, %v625
    %v627 = vsel %vm578, %v521, %v626
    %v628 = vsel %vm580, %v528, %v627
    %v629 = vsel %vm582, %v535, %v628
    %v630 = vsel %vm584, %v542, %v629
    %v631 = vsel %vm586, %v549, %v630
    %v632 = vsel %vm574, %v563, %v556
    %635 = vmatpush.msra.mxu0 %v84
    %636 = vmatpush.msra.mxu0 %v83
    %637 = vmatpush.msra.mxu0 %v82
    %638 = vmatpush.msra.mxu0 %v81
    %639 = vmatpush.msra.mxu0 %v80
    %640 = vmatpush.msra.mxu0 %v79
    %641 = vmatpush.msra.mxu0 %v78
    %642 = vmatpush.msra.mxu0 %v77
    %643 = vmatpush.msra.mxu0 %v76
    %644 = vmatpush.msra.mxu0 %v75
    %645 = vmatpush.msra.mxu0 %v74
    %646 = vmatpush.msra.mxu0 %v73
    %647 = vmatpush.msra.mxu0 %v72
    %648 = vmatpush.msra.mxu0 %v71
    %649 = vmatpush.msra.mxu0 %v70
    %650 = vmatpush.msra.mxu0 %v69
    %651 = vmatmul.f32.gmra.mxu0 %v587
    %v652 = vpop.f32.mrf.mxu0
    %v653 = vadd.f32 0.0, %v652
    %654 = vmatmul.f32.gmra.mxu0 %v588
    %v655 = vpop.f32.mrf.mxu0
    %v656 = vadd.f32 0.0, %v655
    %657 = vdwg.mxu0
    %658 = vmatpush.msra.mxu0 %v100
    %659 = vmatpush.msra.mxu0 %v99
    %660 = vmatpush.msra.mxu0 %v98
    %661 = vmatpush.msra.mxu0 %v97
    %662 = vmatpush.msra.mxu0 %v96
    %663 = vmatpush.msra.mxu0 %v95
    %664 = vmatpush.msra.mxu0 %v94
    %665 = vmatpush.msra.mxu0 %v93
    %666 = vmatpush.msra.mxu0 %v92
    %667 = vmatpush.msra.mxu0 %v91
    %668 = vmatpush.msra.mxu0 %v90
    %669 = vmatpush.msra.mxu0 %v89
    %670 = vmatpush.msra.mxu0 %v88
    %671 = vmatpush.msra.mxu0 %v87
    %672 = vmatpush.msra.mxu0 %v86
    %673 = vmatpush.msra.mxu0 %v85
    %674 = vmatmul.f32.gmra.mxu0 %v598
    %v675 = vpop.f32.mrf.mxu0
    %v676 = vadd.f32 %v653, %v675
    %677 = vmatmul.f32.gmra.mxu0 %v599
    %v678 = vpop.f32.mrf.mxu0
    %v679 = vadd.f32 %v656, %v678
    %680 = vdwg.mxu0
    %681 = vmatpush.msra.mxu0 %v116
    %682 = vmatpush.msra.mxu0 %v115
    %683 = vmatpush.msra.mxu0 %v114
    %684 = vmatpush.msra.mxu0 %v113
    %685 = vmatpush.msra.mxu0 %v112
    %686 = vmatpush.msra.mxu0 %v111
    %687 = vmatpush.msra.mxu0 %v110
    %688 = vmatpush.msra.mxu0 %v109
    %689 = vmatpush.msra.mxu0 %v108
    %690 = vmatpush.msra.mxu0 %v107
    %691 = vmatpush.msra.mxu0 %v106
    %692 = vmatpush.msra.mxu0 %v105
    %693 = vmatpush.msra.mxu0 %v104
    %694 = vmatpush.msra.mxu0 %v103
    %695 = vmatpush.msra.mxu0 %v102
    %696 = vmatpush.msra.mxu0 %v101
    %697 = vmatmul.f32.gmra.mxu0 %v609
    %v698 = vpop.f32.mrf.mxu0
    %v699 = vadd.f32 %v676, %v698
    %700 = vmatmul.f32.gmra.mxu0 %v610
    %v701 = vpop.f32.mrf.mxu0
    %v702 = vadd.f32 %v679, %v701
    %703 = vdwg.mxu0
    %704 = vmatpush.msra.mxu0 %v132
    %705 = vmatpush.msra.mxu0 %v131
    %706 = vmatpush.msra.mxu0 %v130
    %707 = vmatpush.msra.mxu0 %v129
    %708 = vmatpush.msra.mxu0 %v128
    %709 = vmatpush.msra.mxu0 %v127
    %710 = vmatpush.msra.mxu0 %v126
    %711 = vmatpush.msra.mxu0 %v125
    %712 = vmatpush.msra.mxu0 %v124
    %713 = vmatpush.msra.mxu0 %v123
    %714 = vmatpush.msra.mxu0 %v122
    %715 = vmatpush.msra.mxu0 %v121
    %716 = vmatpush.msra.mxu0 %v120
    %717 = vmatpush.msra.mxu0 %v119
    %718 = vmatpush.msra.mxu0 %v118
    %719 = vmatpush.msra.mxu0 %v117
    %720 = vmatmul.f32.gmra.mxu0 %v620
    %v721 = vpop.f32.mrf.mxu0
    %v722 = vadd.f32 %v699, %v721
    %723 = vmatmul.f32.gmra.mxu0 %v621
    %v724 = vpop.f32.mrf.mxu0
    %v725 = vadd.f32 %v702, %v724
    %726 = vdwg.mxu0
    %727 = vmatpush.msra.mxu0 %v148
    %728 = vmatpush.msra.mxu0 %v147
    %729 = vmatpush.msra.mxu0 %v146
    %730 = vmatpush.msra.mxu0 %v145
    %731 = vmatpush.msra.mxu0 %v144
    %732 = vmatpush.msra.mxu0 %v143
    %733 = vmatpush.msra.mxu0 %v142
    %734 = vmatpush.msra.mxu0 %v141
    %735 = vmatpush.msra.mxu0 %v140
    %736 = vmatpush.msra.mxu0 %v139
    %737 = vmatpush.msra.mxu0 %v138
    %738 = vmatpush.msra.mxu0 %v137
    %739 = vmatpush.msra.mxu0 %v136
    %740 = vmatpush.msra.mxu0 %v135
    %741 = vmatpush.msra.mxu0 %v134
    %742 = vmatpush.msra.mxu0 %v133
    %743 = vmatmul.f32.gmra.mxu0 %v631
    %v744 = vpop.f32.mrf.mxu0
    %v745 = vadd.f32 %v722, %v744
    %746 = vmatmul.f32.gmra.mxu0 %v632
    %v747 = vpop.f32.mrf.mxu0
    %v748 = vadd.f32 %v725, %v747
    %749 = vdwg.mxu0
    %v751 = vperm.slane %v167, 0
    %v753 = vmul.f32 %v745, %v751
    %v754 = vmul.f32 %v748, %v751
    %v756 = vperm.slane %v168, 0
    %v758 = vadd.f32 %v753, %v756
    %v759 = vadd.f32 %v754, %v756
    %v760 = vmax.f32 %v758, 0.0
    %v761 = vmax.f32 %v759, 0.0
    %v763 = vrot.slane %v760, 2
    %v764 = vrot.slane %v760, 4
    %v765 = vrot.slane %v760, 6
    %v769 = vsel %vm465, %v760, -inf
    %v770 = vrot.slane %v769, 4
    %v771 = vmax.f32 %v769, %v770
    %v772 = vrot.slane %v771, 2
    %v773 = vmax.f32 %v771, %v772
    %v774 = vrot.slane %v773, 1
    %v775 = vmax.f32 %v773, %v774
    %v776 = vsel %vm465, %v763, -inf
    %v777 = vrot.slane %v776, 4
    %v778 = vmax.f32 %v776, %v777
    %v779 = vrot.slane %v778, 2
    %v780 = vmax.f32 %v778, %v779
    %v781 = vrot.slane %v780, 1
    %v782 = vmax.f32 %v780, %v781
    %v783 = vsel %vm465, %v764, -inf
    %v784 = vrot.slane %v783, 4
    %v785 = vmax.f32 %v783, %v784
    %v786 = vrot.slane %v785, 2
    %v787 = vmax.f32 %v785, %v786
    %v788 = vrot.slane %v787, 1
    %v789 = vmax.f32 %v787, %v788
    %v790 = vsel %vm465, %v765, -inf
    %v791 = vrot.slane %v790, 4
    %v792 = vmax.f32 %v790, %v791
    %v793 = vrot.slane %v792, 2
    %v794 = vmax.f32 %v792, %v793
    %v795 = vrot.slane %v794, 1
    %v796 = vmax.f32 %v794, %v795
    %v797 = vsel %vm465, %v761, -inf
    %v798 = vrot.slane %v797, 4
    %v799 = vmax.f32 %v797, %v798
    %v800 = vrot.slane %v799, 2
    %v801 = vmax.f32 %v799, %v800
    %v802 = vrot.slane %v801, 1
    %v803 = vmax.f32 %v801, %v802
    %v809 = vsel %vm574, %v782, %v775
    %v810 = vsel %vm576, %v789, %v809
    %v811 = vsel %vm578, %v796, %v810
    %v812 = vsel %vm580, %v803, %v811
    %814 = vst [vmem:[%s9] sm:$0x1f] %v812
    %v816 = vperm.slane %v169, 0
    %818 = vmatpush.msra.mxu0 %v164
    %819 = vmatpush.msra.mxu0 %v163
    %820 = vmatpush.msra.mxu0 %v162
    %821 = vmatpush.msra.mxu0 %v161
    %822 = vmatpush.msra.mxu0 %v160
    %823 = vmatpush.msra.mxu0 %v159
    %824 = vmatpush.msra.mxu0 %v158
    %825 = vmatpush.msra.mxu0 %v157
    %826 = vmatpush.msra.mxu0 %v156
    %827 = vmatpush.msra.mxu0 %v155
    %828 = vmatpush.msra.mxu0 %v154
    %829 = vmatpush.msra.mxu0 %v153
    %830 = vmatpush.msra.mxu0 %v152
    %831 = vmatpush.msra.mxu0 %v151
    %832 = vmatpush.msra.mxu0 %v150
    %833 = vmatpush.msra.mxu0 %v149
    %834 = vmatmul.f32.gmra.mxu0 %v812
    %v835 = vpop.f32.mrf.mxu0
    %v836 = vadd.f32 %v816, %v835
    %837 = vdwg.mxu0
    %838 = vst [vmem:[%s10] sm:$0x1f] %v836
    %s839 = scalar_lea.vmem %s0, 32
    %v840 = vld [vmem:[%s839] sm:$0xff]
    %v841 = vld [vmem:[%s839 + $0x8] sm:$0xff]
    %v842 = vld [vmem:[%s839 + $0x10] sm:$0xff]
    %v843 = vld [vmem:[%s839 + $0x18] sm:$0xff]
    %v848 = vrot.slane %v840, 1
    %v849 = vrot.slane %v841, 1
    %v850 = vsel %vm178, %v848, %v849
    %v851 = vrot.slane %v842, 1
    %v852 = vsel %vm178, %v849, %v851
    %v853 = vrot.slane %v843, 1
    %v854 = vsel %vm178, %v851, %v853
    %v855 = vsel %vm188, %v850, 0
    %v857 = vsel %vm188, %v852, 0
    %v859 = vsel %vm188, %v854, 0
    %v861 = vsel %vm188, %v853, 0
    %863 = vmatpush.msra.mxu0 0.0
    %864 = vmatpush.msra.mxu0 0.0
    %865 = vmatpush.msra.mxu0 0.0
    %866 = vmatpush.msra.mxu0 0.0
    %867 = vmatpush.msra.mxu0 0.0
    %868 = vmatpush.msra.mxu0 0.0
    %869 = vmatpush.msra.mxu0 0.0
    %870 = vmatpush.msra.mxu0 0.0
    %871 = vmatpush.msra.mxu0 0.0
    %872 = vmatpush.msra.mxu0 0.0
    %873 = vmatpush.msra.mxu0 0.0
    %874 = vmatpush.msra.mxu0 0.0
    %875 = vmatpush.msra.mxu0 0.0
    %876 = vmatpush.msra.mxu0 0.0
    %877 = vmatpush.msra.mxu0 0.0
    %878 = vmatpush.msra.mxu0 %v198
    %879 = vmatmul.f32.gmra.mxu0 %v855
    %v880 = vpop.f32.mrf.mxu0
    %v881 = vadd.f32 0.0, %v880
    %882 = vmatmul.f32.gmra.mxu0 %v857
    %v883 = vpop.f32.mrf.mxu0
    %v884 = vadd.f32 0.0, %v883
    %885 = vmatmul.f32.gmra.mxu0 %v859
    %v886 = vpop.f32.mrf.mxu0
    %v887 = vadd.f32 0.0, %v886
    %888 = vmatmul.f32.gmra.mxu0 %v861
    %v889 = vpop.f32.mrf.mxu0
    %v890 = vadd.f32 0.0, %v889
    %891 = vdwg.mxu0
    %v892 = vsel %vm188, %v840, 0
    %v894 = vsel %vm188, %v841, 0
    %v896 = vsel %vm188, %v842, 0
    %v898 = vsel %vm188, %v843, 0
    %900 = vmatpush.msra.mxu0 0.0
    %901 = vmatpush.msra.mxu0 0.0
    %902 = vmatpush.msra.mxu0 0.0
    %903 = vmatpush.msra.mxu0 0.0
    %904 = vmatpush.msra.mxu0 0.0
    %905 = vmatpush.msra.mxu0 0.0
    %906 = vmatpush.msra.mxu0 0.0
    %907 = vmatpush.msra.mxu0 0.0
    %908 = vmatpush.msra.mxu0 0.0
    %909 = vmatpush.msra.mxu0 0.0
    %910 = vmatpush.msra.mxu0 0.0
    %911 = vmatpush.msra.mxu0 0.0
    %912 = vmatpush.msra.mxu0 0.0
    %913 = vmatpush.msra.mxu0 0.0
    %914 = vmatpush.msra.mxu0 0.0
    %915 = vmatpush.msra.mxu0 %v237
    %916 = vmatmul.f32.gmra.mxu0 %v892
    %v917 = vpop.f32.mrf.mxu0
    %v918 = vadd.f32 %v881, %v917
    %919 = vmatmul.f32.gmra.mxu0 %v894
    %v920 = vpop.f32.mrf.mxu0
    %v921 = vadd.f32 %v884, %v920
    %922 = vmatmul.f32.gmra.mxu0 %v896
    %v923 = vpop.f32.mrf.mxu0
    %v924 = vadd.f32 %v887, %v923
    %925 = vmatmul.f32.gmra.mxu0 %v898
    %v926 = vpop.f32.mrf.mxu0
    %v927 = vadd.f32 %v890, %v926
    %928 = vdwg.mxu0
    %v929 = vrot.slane %v840, 2
    %v930 = vrot.slane %v841, 2
    %v931 = vsel %vm268, %v929, %v930
    %v932 = vrot.slane %v842, 2
    %v933 = vsel %vm268, %v930, %v932
    %v934 = vrot.slane %v843, 2
    %v935 = vsel %vm268, %v932, %v934
    %v936 = vsel %vm188, %v931, 0
    %v938 = vsel %vm188, %v933, 0
    %v940 = vsel %vm188, %v935, 0
    %v942 = vsel %vm188, %v934, 0
    %944 = vmatpush.msra.mxu0 0.0
    %945 = vmatpush.msra.mxu0 0.0
    %946 = vmatpush.msra.mxu0 0.0
    %947 = vmatpush.msra.mxu0 0.0
    %948 = vmatpush.msra.mxu0 0.0
    %949 = vmatpush.msra.mxu0 0.0
    %950 = vmatpush.msra.mxu0 0.0
    %951 = vmatpush.msra.mxu0 0.0
    %952 = vmatpush.msra.mxu0 0.0
    %953 = vmatpush.msra.mxu0 0.0
    %954 = vmatpush.msra.mxu0 0.0
    %955 = vmatpush.msra.mxu0 0.0
    %956 = vmatpush.msra.mxu0 0.0
    %957 = vmatpush.msra.mxu0 0.0
    %958 = vmatpush.msra.mxu0 0.0
    %959 = vmatpush.msra.mxu0 %v285
    %960 = vmatmul.f32.gmra.mxu0 %v936
    %v961 = vpop.f32.mrf.mxu0
    %v962 = vadd.f32 0.0, %v961
    %963 = vmatmul.f32.gmra.mxu0 %v938
    %v964 = vpop.f32.mrf.mxu0
    %v965 = vadd.f32 0.0, %v964
    %966 = vmatmul.f32.gmra.mxu0 %v940
    %v967 = vpop.f32.mrf.mxu0
    %v968 = vadd.f32 0.0, %v967
    %969 = vmatmul.f32.gmra.mxu0 %v942
    %v970 = vpop.f32.mrf.mxu0
    %v971 = vadd.f32 0.0, %v970
    %972 = vdwg.mxu0
    %v973 = vadd.f32 %v918, %v962
    %v974 = vadd.f32 %v921, %v965
    %v975 = vadd.f32 %v924, %v968
    %v976 = vadd.f32 %v927, %v971
    %v977 = vrot.slane %v840, 3
    %v978 = vrot.slane %v841, 3
    %v979 = vsel %vm320, %v977, %v978
    %v980 = vrot.slane %v842, 3
    %v981 = vsel %vm320, %v978, %v980
    %v982 = vrot.slane %v843, 3
    %v983 = vsel %vm320, %v980, %v982
    %v984 = vsel %vm188, %v979, 0
    %v986 = vsel %vm188, %v981, 0
    %v988 = vsel %vm188, %v983, 0
    %v990 = vsel %vm188, %v982, 0
    %992 = vmatpush.msra.mxu0 0.0
    %993 = vmatpush.msra.mxu0 0.0
    %994 = vmatpush.msra.mxu0 0.0
    %995 = vmatpush.msra.mxu0 0.0
    %996 = vmatpush.msra.mxu0 0.0
    %997 = vmatpush.msra.mxu0 0.0
    %998 = vmatpush.msra.mxu0 0.0
    %999 = vmatpush.msra.mxu0 0.0
    %1000 = vmatpush.msra.mxu0 0.0
    %1001 = vmatpush.msra.mxu0 0.0
    %1002 = vmatpush.msra.mxu0 0.0
    %1003 = vmatpush.msra.mxu0 0.0
    %1004 = vmatpush.msra.mxu0 0.0
    %1005 = vmatpush.msra.mxu0 0.0
    %1006 = vmatpush.msra.mxu0 0.0
    %1007 = vmatpush.msra.mxu0 %v337
    %1008 = vmatmul.f32.gmra.mxu0 %v984
    %v1009 = vpop.f32.mrf.mxu0
    %v1010 = vadd.f32 0.0, %v1009
    %1011 = vmatmul.f32.gmra.mxu0 %v986
    %v1012 = vpop.f32.mrf.mxu0
    %v1013 = vadd.f32 0.0, %v1012
    %1014 = vmatmul.f32.gmra.mxu0 %v988
    %v1015 = vpop.f32.mrf.mxu0
    %v1016 = vadd.f32 0.0, %v1015
    %1017 = vmatmul.f32.gmra.mxu0 %v990
    %v1018 = vpop.f32.mrf.mxu0
    %v1019 = vadd.f32 0.0, %v1018
    %1020 = vdwg.mxu0
    %v1021 = vadd.f32 %v973, %v1010
    %v1022 = vadd.f32 %v974, %v1013
    %v1023 = vadd.f32 %v975, %v1016
    %v1024 = vadd.f32 %v976, %v1019
    %v1025 = vrot.slane %v840, 4
    %v1026 = vrot.slane %v841, 4
    %v1027 = vsel %vm197, %v1025, %v1026
    %v1028 = vrot.slane %v842, 4
    %v1029 = vsel %vm197, %v1026, %v1028
    %v1030 = vrot.slane %v843, 4
    %v1031 = vsel %vm197, %v1028, %v1030
    %v1032 = vsel %vm188, %v1027, 0
    %v1034 = vsel %vm188, %v1029, 0
    %v1036 = vsel %vm188, %v1031, 0
    %v1038 = vsel %vm188, %v1030, 0
    %1040 = vmatpush.msra.mxu0 0.0
    %1041 = vmatpush.msra.mxu0 0.0
    %1042 = vmatpush.msra.mxu0 0.0
    %1043 = vmatpush.msra.mxu0 0.0
    %1044 = vmatpush.msra.mxu0 0.0
    %1045 = vmatpush.msra.mxu0 0.0
    %1046 = vmatpush.msra.mxu0 0.0
    %1047 = vmatpush.msra.mxu0 0.0
    %1048 = vmatpush.msra.mxu0 0.0
    %1049 = vmatpush.msra.mxu0 0.0
    %1050 = vmatpush.msra.mxu0 0.0
    %1051 = vmatpush.msra.mxu0 0.0
    %1052 = vmatpush.msra.mxu0 0.0
    %1053 = vmatpush.msra.mxu0 0.0
    %1054 = vmatpush.msra.mxu0 0.0
    %1055 = vmatpush.msra.mxu0 %v388
    %1056 = vmatmul.f32.gmra.mxu0 %v1032
    %v1057 = vpop.f32.mrf.mxu0
    %v1058 = vadd.f32 0.0, %v1057
    %1059 = vmatmul.f32.gmra.mxu0 %v1034
    %v1060 = vpop.f32.mrf.mxu0
    %v1061 = vadd.f32 0.0, %v1060
    %1062 = vmatmul.f32.gmra.mxu0 %v1036
    %v1063 = vpop.f32.mrf.mxu0
    %v1064 = vadd.f32 0.0, %v1063
    %1065 = vmatmul.f32.gmra.mxu0 %v1038
    %v1066 = vpop.f32.mrf.mxu0
    %v1067 = vadd.f32 0.0, %v1066
    %1068 = vdwg.mxu0
    %v1069 = vadd.f32 %v1021, %v1058
    %v1070 = vadd.f32 %v1022, %v1061
    %v1071 = vadd.f32 %v1023, %v1064
    %v1072 = vadd.f32 %v1024, %v1067
    %v1073 = vmul.f32 %v1069, %v424
    %v1074 = vmul.f32 %v1070, %v424
    %v1075 = vmul.f32 %v1071, %v424
    %v1076 = vmul.f32 %v1072, %v424
    %v1077 = vadd.f32 %v1073, %v431
    %v1078 = vadd.f32 %v1074, %v431
    %v1079 = vadd.f32 %v1075, %v431
    %v1080 = vadd.f32 %v1076, %v431
    %v1081 = vmax.f32 %v1077, 0.0
    %v1082 = vmax.f32 %v1078, 0.0
    %v1083 = vmax.f32 %v1079, 0.0
    %v1084 = vmax.f32 %v1080, 0.0
    %v1089 = vrot.slane %v1081, 2
    %v1090 = vrot.slane %v1081, 4
    %v1091 = vrot.slane %v1081, 6
    %v1092 = vrot.slane %v1082, 2
    %v1093 = vrot.slane %v1082, 4
    %v1094 = vrot.slane %v1082, 6
    %v1095 = vrot.slane %v1083, 2
    %v1096 = vrot.slane %v1083, 4
    %v1097 = vrot.slane %v1083, 6
    %v1098 = vrot.slane %v1084, 2
    %v1109 = vsel %vm465, %v1081, -inf
    %v1110 = vrot.slane %v1109, 4
    %v1111 = vmax.f32 %v1109, %v1110
    %v1112 = vrot.slane %v1111, 2
    %v1113 = vmax.f32 %v1111, %v1112
    %v1114 = vrot.slane %v1113, 1
    %v1115 = vmax.f32 %v1113, %v1114
    %v1116 = vsel %vm465, %v1089, -inf
    %v1117 = vrot.slane %v1116, 4
    %v1118 = vmax.f32 %v1116, %v1117
    %v1119 = vrot.slane %v1118, 2
    %v1120 = vmax.f32 %v1118, %v1119
    %v1121 = vrot.slane %v1120, 1
    %v1122 = vmax.f32 %v1120, %v1121
    %v1123 = vsel %vm465, %v1090, -inf
    %v1124 = vrot.slane %v1123, 4
    %v1125 = vmax.f32 %v1123, %v1124
    %v1126 = vrot.slane %v1125, 2
    %v1127 = vmax.f32 %v1125, %v1126
    %v1128 = vrot.slane %v1127, 1
    %v1129 = vmax.f32 %v1127, %v1128
    %v1130 = vsel %vm465, %v1091, -inf
    %v1131 = vrot.slane %v1130, 4
    %v1132 = vmax.f32 %v1130, %v1131
    %v1133 = vrot.slane %v1132, 2
    %v1134 = vmax.f32 %v1132, %v1133
    %v1135 = vrot.slane %v1134, 1
    %v1136 = vmax.f32 %v1134, %v1135
    %v1137 = vsel %vm465, %v1082, -inf
    %v1138 = vrot.slane %v1137, 4
    %v1139 = vmax.f32 %v1137, %v1138
    %v1140 = vrot.slane %v1139, 2
    %v1141 = vmax.f32 %v1139, %v1140
    %v1142 = vrot.slane %v1141, 1
    %v1143 = vmax.f32 %v1141, %v1142
    %v1144 = vsel %vm465, %v1092, -inf
    %v1145 = vrot.slane %v1144, 4
    %v1146 = vmax.f32 %v1144, %v1145
    %v1147 = vrot.slane %v1146, 2
    %v1148 = vmax.f32 %v1146, %v1147
    %v1149 = vrot.slane %v1148, 1
    %v1150 = vmax.f32 %v1148, %v1149
    %v1151 = vsel %vm465, %v1093, -inf
    %v1152 = vrot.slane %v1151, 4
    %v1153 = vmax.f32 %v1151, %v1152
    %v1154 = vrot.slane %v1153, 2
    %v1155 = vmax.f32 %v1153, %v1154
    %v1156 = vrot.slane %v1155, 1
    %v1157 = vmax.f32 %v1155, %v1156
    %v1158 = vsel %vm465, %v1094, -inf
    %v1159 = vrot.slane %v1158, 4
    %v1160 = vmax.f32 %v1158, %v1159
    %v1161 = vrot.slane %v1160, 2
    %v1162 = vmax.f32 %v1160, %v1161
    %v1163 = vrot.slane %v1162, 1
    %v1164 = vmax.f32 %v1162, %v1163
    %v1165 = vsel %vm465, %v1083, -inf
    %v1166 = vrot.slane %v1165, 4
    %v1167 = vmax.f32 %v1165, %v1166
    %v1168 = vrot.slane %v1167, 2
    %v1169 = vmax.f32 %v1167, %v1168
    %v1170 = vrot.slane %v1169, 1
    %v1171 = vmax.f32 %v1169, %v1170
    %v1172 = vsel %vm465, %v1095, -inf
    %v1173 = vrot.slane %v1172, 4
    %v1174 = vmax.f32 %v1172, %v1173
    %v1175 = vrot.slane %v1174, 2
    %v1176 = vmax.f32 %v1174, %v1175
    %v1177 = vrot.slane %v1176, 1
    %v1178 = vmax.f32 %v1176, %v1177
    %v1179 = vsel %vm465, %v1096, -inf
    %v1180 = vrot.slane %v1179, 4
    %v1181 = vmax.f32 %v1179, %v1180
    %v1182 = vrot.slane %v1181, 2
    %v1183 = vmax.f32 %v1181, %v1182
    %v1184 = vrot.slane %v1183, 1
    %v1185 = vmax.f32 %v1183, %v1184
    %v1186 = vsel %vm465, %v1097, -inf
    %v1187 = vrot.slane %v1186, 4
    %v1188 = vmax.f32 %v1186, %v1187
    %v1189 = vrot.slane %v1188, 2
    %v1190 = vmax.f32 %v1188, %v1189
    %v1191 = vrot.slane %v1190, 1
    %v1192 = vmax.f32 %v1190, %v1191
    %v1193 = vsel %vm465, %v1084, -inf
    %v1194 = vrot.slane %v1193, 4
    %v1195 = vmax.f32 %v1193, %v1194
    %v1196 = vrot.slane %v1195, 2
    %v1197 = vmax.f32 %v1195, %v1196
    %v1198 = vrot.slane %v1197, 1
    %v1199 = vmax.f32 %v1197, %v1198
    %v1200 = vsel %vm465, %v1098, -inf
    %v1201 = vrot.slane %v1200, 4
    %v1202 = vmax.f32 %v1200, %v1201
    %v1203 = vrot.slane %v1202, 2
    %v1204 = vmax.f32 %v1202, %v1203
    %v1205 = vrot.slane %v1204, 1
    %v1206 = vmax.f32 %v1204, %v1205
    %v1217 = vsel %vm574, %v1122, %v1115
    %v1218 = vsel %vm576, %v1129, %v1217
    %v1219 = vsel %vm578, %v1136, %v1218
    %v1220 = vsel %vm580, %v1143, %v1219
    %v1221 = vsel %vm582, %v1150, %v1220
    %v1222 = vsel %vm584, %v1157, %v1221
    %v1223 = vsel %vm586, %v1164, %v1222
    %v1224 = vsel %vm574, %v1178, %v1171
    %v1228 = vsel %vm574, %v1129, %v1122
    %v1229 = vsel %vm576, %v1136, %v1228
    %v1230 = vsel %vm578, %v1143, %v1229
    %v1231 = vsel %vm580, %v1150, %v1230
    %v1232 = vsel %vm582, %v1157, %v1231
    %v1233 = vsel %vm584, %v1164, %v1232
    %v1234 = vsel %vm586, %v1171, %v1233
    %v1235 = vsel %vm574, %v1185, %v1178
    %v1239 = vsel %vm574, %v1136, %v1129
    %v1240 = vsel %vm576, %v1143, %v1239
    %v1241 = vsel %vm578, %v1150, %v1240
    %v1242 = vsel %vm580, %v1157, %v1241
    %v1243 = vsel %vm582, %v1164, %v1242
    %v1244 = vsel %vm584, %v1171, %v1243
    %v1245 = vsel %vm586, %v1178, %v1244
    %v1246 = vsel %vm574, %v1192, %v1185
    %v1250 = vsel %vm574, %v1143, %v1136
    %v1251 = vsel %vm576, %v1150, %v1250
    %v1252 = vsel %vm578, %v1157, %v1251
    %v1253 = vsel %vm580, %v1164, %v1252
    %v1254 = vsel %vm582, %v1171, %v1253
    %v1255 = vsel %vm584, %v1178, %v1254
    %v1256 = vsel %vm586, %v1185, %v1255
    %v1257 = vsel %vm574, %v1199, %v1192
    %v1261 = vsel %vm574, %v1150, %v1143
    %v1262 = vsel %vm576, %v1157, %v1261
    %v1263 = vsel %vm578, %v1164, %v1262
    %v1264 = vsel %vm580, %v1171, %v1263
    %v1265 = vsel %vm582, %v1178, %v1264
    %v1266 = vsel %vm584, %v1185, %v1265
    %v1267 = vsel %vm586, %v1192, %v1266
    %v1268 = vsel %vm574, %v1206, %v1199
    %1271 = vmatpush.msra.mxu0 %v84
    %1272 = vmatpush.msra.mxu0 %v83
    %1273 = vmatpush.msra.mxu0 %v82
    %1274 = vmatpush.msra.mxu0 %v81
    %1275 = vmatpush.msra.mxu0 %v80
    %1276 = vmatpush.msra.mxu0 %v79
    %1277 = vmatpush.msra.mxu0 %v78
    %1278 = vmatpush.msra.mxu0 %v77
    %1279 = vmatpush.msra.mxu0 %v76
    %1280 = vmatpush.msra.mxu0 %v75
    %1281 = vmatpush.msra.mxu0 %v74
    %1282 = vmatpush.msra.mxu0 %v73
    %1283 = vmatpush.msra.mxu0 %v72
    %1284 = vmatpush.msra.mxu0 %v71
    %1285 = vmatpush.msra.mxu0 %v70
    %1286 = vmatpush.msra.mxu0 %v69
    %1287 = vmatmul.f32.gmra.mxu0 %v1223
    %v1288 = vpop.f32.mrf.mxu0
    %v1289 = vadd.f32 0.0, %v1288
    %1290 = vmatmul.f32.gmra.mxu0 %v1224
    %v1291 = vpop.f32.mrf.mxu0
    %v1292 = vadd.f32 0.0, %v1291
    %1293 = vdwg.mxu0
    %1294 = vmatpush.msra.mxu0 %v100
    %1295 = vmatpush.msra.mxu0 %v99
    %1296 = vmatpush.msra.mxu0 %v98
    %1297 = vmatpush.msra.mxu0 %v97
    %1298 = vmatpush.msra.mxu0 %v96
    %1299 = vmatpush.msra.mxu0 %v95
    %1300 = vmatpush.msra.mxu0 %v94
    %1301 = vmatpush.msra.mxu0 %v93
    %1302 = vmatpush.msra.mxu0 %v92
    %1303 = vmatpush.msra.mxu0 %v91
    %1304 = vmatpush.msra.mxu0 %v90
    %1305 = vmatpush.msra.mxu0 %v89
    %1306 = vmatpush.msra.mxu0 %v88
    %1307 = vmatpush.msra.mxu0 %v87
    %1308 = vmatpush.msra.mxu0 %v86
    %1309 = vmatpush.msra.mxu0 %v85
    %1310 = vmatmul.f32.gmra.mxu0 %v1234
    %v1311 = vpop.f32.mrf.mxu0
    %v1312 = vadd.f32 %v1289, %v1311
    %1313 = vmatmul.f32.gmra.mxu0 %v1235
    %v1314 = vpop.f32.mrf.mxu0
    %v1315 = vadd.f32 %v1292, %v1314
    %1316 = vdwg.mxu0
    %1317 = vmatpush.msra.mxu0 %v116
    %1318 = vmatpush.msra.mxu0 %v115
    %1319 = vmatpush.msra.mxu0 %v114
    %1320 = vmatpush.msra.mxu0 %v113
    %1321 = vmatpush.msra.mxu0 %v112
    %1322 = vmatpush.msra.mxu0 %v111
    %1323 = vmatpush.msra.mxu0 %v110
    %1324 = vmatpush.msra.mxu0 %v109
    %1325 = vmatpush.msra.mxu0 %v108
    %1326 = vmatpush.msra.mxu0 %v107
    %1327 = vmatpush.msra.mxu0 %v106
    %1328 = vmatpush.msra.mxu0 %v105
    %1329 = vmatpush.msra.mxu0 %v104
    %1330 = vmatpush.msra.mxu0 %v103
    %1331 = vmatpush.msra.mxu0 %v102
    %1332 = vmatpush.msra.mxu0 %v101
    %1333 = vmatmul.f32.gmra.mxu0 %v1245
    %v1334 = vpop.f32.mrf.mxu0
    %v1335 = vadd.f32 %v1312, %v1334
    %1336 = vmatmul.f32.gmra.mxu0 %v1246
    %v1337 = vpop.f32.mrf.mxu0
    %v1338 = vadd.f32 %v1315, %v1337
    %1339 = vdwg.mxu0
    %1340 = vmatpush.msra.mxu0 %v132
    %1341 = vmatpush.msra.mxu0 %v131
    %1342 = vmatpush.msra.mxu0 %v130
    %1343 = vmatpush.msra.mxu0 %v129
    %1344 = vmatpush.msra.mxu0 %v128
    %1345 = vmatpush.msra.mxu0 %v127
    %1346 = vmatpush.msra.mxu0 %v126
    %1347 = vmatpush.msra.mxu0 %v125
    %1348 = vmatpush.msra.mxu0 %v124
    %1349 = vmatpush.msra.mxu0 %v123
    %1350 = vmatpush.msra.mxu0 %v122
    %1351 = vmatpush.msra.mxu0 %v121
    %1352 = vmatpush.msra.mxu0 %v120
    %1353 = vmatpush.msra.mxu0 %v119
    %1354 = vmatpush.msra.mxu0 %v118
    %1355 = vmatpush.msra.mxu0 %v117
    %1356 = vmatmul.f32.gmra.mxu0 %v1256
    %v1357 = vpop.f32.mrf.mxu0
    %v1358 = vadd.f32 %v1335, %v1357
    %1359 = vmatmul.f32.gmra.mxu0 %v1257
    %v1360 = vpop.f32.mrf.mxu0
    %v1361 = vadd.f32 %v1338, %v1360
    %1362 = vdwg.mxu0
    %1363 = vmatpush.msra.mxu0 %v148
    %1364 = vmatpush.msra.mxu0 %v147
    %1365 = vmatpush.msra.mxu0 %v146
    %1366 = vmatpush.msra.mxu0 %v145
    %1367 = vmatpush.msra.mxu0 %v144
    %1368 = vmatpush.msra.mxu0 %v143
    %1369 = vmatpush.msra.mxu0 %v142
    %1370 = vmatpush.msra.mxu0 %v141
    %1371 = vmatpush.msra.mxu0 %v140
    %1372 = vmatpush.msra.mxu0 %v139
    %1373 = vmatpush.msra.mxu0 %v138
    %1374 = vmatpush.msra.mxu0 %v137
    %1375 = vmatpush.msra.mxu0 %v136
    %1376 = vmatpush.msra.mxu0 %v135
    %1377 = vmatpush.msra.mxu0 %v134
    %1378 = vmatpush.msra.mxu0 %v133
    %1379 = vmatmul.f32.gmra.mxu0 %v1267
    %v1380 = vpop.f32.mrf.mxu0
    %v1381 = vadd.f32 %v1358, %v1380
    %1382 = vmatmul.f32.gmra.mxu0 %v1268
    %v1383 = vpop.f32.mrf.mxu0
    %v1384 = vadd.f32 %v1361, %v1383
    %1385 = vdwg.mxu0
    %v1386 = vmul.f32 %v1381, %v751
    %v1387 = vmul.f32 %v1384, %v751
    %v1388 = vadd.f32 %v1386, %v756
    %v1389 = vadd.f32 %v1387, %v756
    %v1390 = vmax.f32 %v1388, 0.0
    %v1391 = vmax.f32 %v1389, 0.0
    %v1393 = vrot.slane %v1390, 2
    %v1394 = vrot.slane %v1390, 4
    %v1395 = vrot.slane %v1390, 6
    %v1399 = vsel %vm465, %v1390, -inf
    %v1400 = vrot.slane %v1399, 4
    %v1401 = vmax.f32 %v1399, %v1400
    %v1402 = vrot.slane %v1401, 2
    %v1403 = vmax.f32 %v1401, %v1402
    %v1404 = vrot.slane %v1403, 1
    %v1405 = vmax.f32 %v1403, %v1404
    %v1406 = vsel %vm465, %v1393, -inf
    %v1407 = vrot.slane %v1406, 4
    %v1408 = vmax.f32 %v1406, %v1407
    %v1409 = vrot.slane %v1408, 2
    %v1410 = vmax.f32 %v1408, %v1409
    %v1411 = vrot.slane %v1410, 1
    %v1412 = vmax.f32 %v1410, %v1411
    %v1413 = vsel %vm465, %v1394, -inf
    %v1414 = vrot.slane %v1413, 4
    %v1415 = vmax.f32 %v1413, %v1414
    %v1416 = vrot.slane %v1415, 2
    %v1417 = vmax.f32 %v1415, %v1416
    %v1418 = vrot.slane %v1417, 1
    %v1419 = vmax.f32 %v1417, %v1418
    %v1420 = vsel %vm465, %v1395, -inf
    %v1421 = vrot.slane %v1420, 4
    %v1422 = vmax.f32 %v1420, %v1421
    %v1423 = vrot.slane %v1422, 2
    %v1424 = vmax.f32 %v1422, %v1423
    %v1425 = vrot.slane %v1424, 1
    %v1426 = vmax.f32 %v1424, %v1425
    %v1427 = vsel %vm465, %v1391, -inf
    %v1428 = vrot.slane %v1427, 4
    %v1429 = vmax.f32 %v1427, %v1428
    %v1430 = vrot.slane %v1429, 2
    %v1431 = vmax.f32 %v1429, %v1430
    %v1432 = vrot.slane %v1431, 1
    %v1433 = vmax.f32 %v1431, %v1432
    %v1439 = vsel %vm574, %v1412, %v1405
    %v1440 = vsel %vm576, %v1419, %v1439
    %v1441 = vsel %vm578, %v1426, %v1440
    %v1442 = vsel %vm580, %v1433, %v1441
    %s1444 = scalar_lea.vmem %s9, 8
    %1445 = vst [vmem:[%s1444] sm:$0x1f] %v1442
    %1446 = vmatpush.msra.mxu0 %v164
    %1447 = vmatpush.msra.mxu0 %v163
    %1448 = vmatpush.msra.mxu0 %v162
    %1449 = vmatpush.msra.mxu0 %v161
    %1450 = vmatpush.msra.mxu0 %v160
    %1451 = vmatpush.msra.mxu0 %v159
    %1452 = vmatpush.msra.mxu0 %v158
    %1453 = vmatpush.msra.mxu0 %v157
    %1454 = vmatpush.msra.mxu0 %v156
    %1455 = vmatpush.msra.mxu0 %v155
    %1456 = vmatpush.msra.mxu0 %v154
    %1457 = vmatpush.msra.mxu0 %v153
    %1458 = vmatpush.msra.mxu0 %v152
    %1459 = vmatpush.msra.mxu0 %v151
    %1460 = vmatpush.msra.mxu0 %v150
    %1461 = vmatpush.msra.mxu0 %v149
    %1462 = vmatmul.f32.gmra.mxu0 %v1442
    %v1463 = vpop.f32.mrf.mxu0
    %v1464 = vadd.f32 %v816, %v1463
    %1465 = vdwg.mxu0
    %s1466 = scalar_lea.vmem %s10, 8
    %1467 = vst [vmem:[%s1466] sm:$0x1f] %v1464
    // Predicated region
    $region46: #{tpu_custom_call.1} parent=1 // pred_check
      _
    $region47: #{tpu_custom_call.1} parent=1 // pred_check_branch
      %1469 = sbr.rel (0) target = $region49
    $region48: #{tpu_custom_call.1} parent=1 // pred_region
      _
    $region49: #{tpu_custom_call.1} parent=1 // pred_fallthru
      _
    // Predicated region
    $region50: #{tpu_custom_call.1} parent=1 // pred_check
      _
    $region51: #{tpu_custom_call.1} parent=1 // pred_check_branch
      %1471 = sbr.rel (0) target = $region53
    $region52: #{tpu_custom_call.1} parent=1 // pred_region
      _
    $region53: #{tpu_custom_call.1} parent=1 // pred_fallthru
      _
    // Predicated region
    $region54: #{tpu_custom_call.1} parent=1 // pred_check
      _
    $region55: #{tpu_custom_call.1} parent=1 // pred_check_branch
      %1473 = sbr.rel (0) target = $region57
    $region56: #{tpu_custom_call.1} parent=1 // pred_region
      _
    $region57: #{tpu_custom_call.1} parent=1 // pred_fallthru
      _
    // Predicated region
    $region58: #{tpu_custom_call.1} parent=1 // pred_check
      _
    $region59: #{tpu_custom_call.1} parent=1 // pred_check_branch
      %1475 = sbr.rel (0) target = $region61
    $region60: #{tpu_custom_call.1} parent=1 // pred_region
      _
    $region61: #{tpu_custom_call.1} parent=1 // pred_fallthru
      _
    %1476 = vsyncpa [#allocation3], 1
    %1477 = vsyncpa [#allocation5], 1

</llo_original>
